<compile_context>
chip_gen: v5e
topology: v5e:2x2
jax: 0.10.0
libtpu: 0.0.40
codegen_flags: <defaults>
</compile_context>

<pallas_src>
import functools
import math

import jax
import jax.numpy as jnp
from jax.experimental import pallas as pl
from jax.experimental.pallas import tpu as pltpu


def _encoder_layer_kernel(
    # inputs
    q_ref, k_ref, v_ref, mask_ref,
    wq_ref, wk_ref, wv_ref, wo_ref,
    ln1_g_ref, ln1_b_ref, ln2_g_ref, ln2_b_ref,
    w1_ref, b1_ref, w2_ref, b2_ref,
    # outputs
    out_ref,
    *, b_blk, seq, heads, depth, eps,
):
    f32 = jnp.float32
    bf16 = jnp.bfloat16
    dim = heads * depth
    rows = b_blk * seq
    hb = heads * b_blk
    inv_norm = 1.0 / math.sqrt(depth)

    # Flatten the (b_blk, S, D) block into a tall (rows, D) slab.
    q2 = q_ref[...].reshape(rows, dim)            # f32 (kept for the residual)
    k2 = k_ref[...].reshape(rows, dim)            # bf16 (pre-cast in wrapper)
    v2 = v_ref[...].reshape(rows, dim)            # bf16

    qb = q2.astype(bf16)

    # --- head-major QKV projections ---
    # Weights are pre-reshaped host-side to (H, D, depth); a head-batched MXU
    # matmul produces head-major activations directly (no lane slicing/stacking).
    q_h = jnp.broadcast_to(qb[None], (heads, rows, dim))
    k_h = jnp.broadcast_to(k2[None], (heads, rows, dim))
    v_h = jnp.broadcast_to(v2[None], (heads, rows, dim))

    qp = jnp.einsum('hrD,hDd->hrd', q_h, wq_ref[...], preferred_element_type=f32)
    kp = jnp.einsum('hrD,hDd->hrd', k_h, wk_ref[...], preferred_element_type=f32)
    vp = jnp.einsum('hrD,hDd->hrd', v_h, wv_ref[...], preferred_element_type=f32)
    qp = qp * inv_norm                 # fold 1/sqrt(depth) once; no softmax divide

    # Merge (head, batch) into one batch axis: (H, b*S, d) -> (H*b, S, d) (free).
    qph = qp.astype(bf16).reshape(hb, seq, depth)
    kph = kp.astype(bf16).reshape(hb, seq, depth)
    vph = vp.astype(bf16).reshape(hb, seq, depth)

    # Additive mask bias, built once per grid step (reference: g -= mask * 1e9).
    mbias = mask_ref[...] * jnp.float32(-1e9)                 # (S, S)

    # --- attention, batched over all (head, batch) pairs in one shot ---
    s = jnp.einsum('nqd,nkd->nqk', qph, kph, preferred_element_type=f32)
    s = s + mbias[None, :, :]
    s = s - jnp.max(s, axis=-1, keepdims=True)
    p = jnp.exp(s)
    p = p * pl.reciprocal(jnp.sum(p, axis=-1, keepdims=True), approx=True)
    ctx = jnp.einsum('nqk,nkd->nqd', p.astype(bf16), vph,
                     preferred_element_type=f32)              # (H*b, S, d)

    # --- output projection ---
    # Wo pre-reshaped to (H, depth, D): head-batched matmul then a leading-axis
    # (VPU) sum.  No scratch slab, no depth-wide masked stores, no read-back.
    ctx_h = ctx.reshape(heads, rows, depth).astype(bf16)
    att_h = jnp.einsum('hrd,hdD->hrD', ctx_h, wo_ref[...],
                       preferred_element_type=f32)            # (H, rows, D)
    att = jnp.sum(att_h, axis=0)                              # (rows, D) f32

    # --- residual + LayerNorm 1 (f32) ---
    x = att + q2
    mu = jnp.mean(x, axis=-1, keepdims=True)
    xc = x - mu
    var = jnp.mean(xc * xc, axis=-1, keepdims=True)
    x = xc * jax.lax.rsqrt(var + eps)
    x = x * ln1_g_ref[...] + ln1_b_ref[...]

    # --- feed-forward (bf16 MXU inputs, f32 accumulate) ---
    h1 = jnp.dot(x.astype(bf16), w1_ref[...], preferred_element_type=f32) + b1_ref[...]
    h1 = jnp.maximum(h1, 0.0)
    d = jnp.dot(h1.astype(bf16), w2_ref[...], preferred_element_type=f32) + b2_ref[...]

    # --- residual + LayerNorm 2 (f32) ---
    x = d + x
    mu = jnp.mean(x, axis=-1, keepdims=True)
    xc = x - mu
    var = jnp.mean(xc * xc, axis=-1, keepdims=True)
    x = xc * jax.lax.rsqrt(var + eps)
    x = x * ln2_g_ref[...] + ln2_b_ref[...]

    out_ref[...] = x.reshape(b_blk, seq, dim).astype(out_ref.dtype)


def _vmem_budget_bytes():
    """Per-generation VMEM budget: ~3/4 of physical, capped at 100 MiB.

    v7x (64 MiB physical) -> ~48 MiB; v5e/v6e (128 MiB) -> ~96-100 MiB.
    """
    cap = 128 * 1024 * 1024
    try:
        info = pltpu.get_tpu_info()
        cap = int(getattr(info, "vmem_capacity_bytes", cap))
    except Exception:
        pass
    return min(cap * 3 // 4, 100 * 1024 * 1024)


def _pick_b_blk(B, S, D, heads, hidden, budget, target_rows=512):
    """Largest divisor of B that (a) keeps grid >= 2 (both v7x TensorCores busy),
    (b) keeps the slab near `target_rows` MXU rows, (c) fits the VMEM budget."""
    weights = 2 * (4 * D * D + 2 * D * hidden) + 4 * (6 * D + hidden + S * S)
    best = 1
    for c in range(1, B + 1):
        if B % c:
            continue
        if B >= 2 and (B // c) < 2:          # keep >= 2 grid steps for megacore
            continue
        rows = c * S
        if rows > max(S, target_rows):
            continue
        act = rows * D
        est = (24 * act                      # double-buffered q/k/v/out blocks
               + 10 * heads * act            # bf16 broadcasts + f32 head-major proj
               + 4 * heads * act             # head-batched O-proj partials (f32)
               + 12 * heads * c * S * S      # scores / probs / ctx
               + 8 * act + 4 * rows * hidden  # LN / FFN intermediates
               + weights)
        if est <= int(budget * 0.7):
            best = max(best, c)
    return best


def encoder_layer(q, k, v, mask, params, *, heads):
    """q,k,v: (B,S,D) float32. mask: broadcastable to (1,1,S,S). Returns (B,S,D) f32."""
    B, S, D = q.shape
    depth = D // heads
    eps = 1e-5
    bf16 = jnp.bfloat16
    hidden = params["W1"].shape[1]

    budget = _vmem_budget_bytes()
    b_blk = _pick_b_blk(B, S, D, heads, hidden, budget)
    grid = (B // b_blk,)

    # Head-major weight layouts (host-side, one-time).
    wq = params["Q"].reshape(D, heads, depth).transpose(1, 0, 2).astype(bf16)  # (H,D,d)
    wk = params["K"].reshape(D, heads, depth).transpose(1, 0, 2).astype(bf16)
    wv = params["V"].reshape(D, heads, depth).transpose(1, 0, 2).astype(bf16)
    wo = params["O"].reshape(heads, depth, D).astype(bf16)                      # (H,d,D)
    w1 = params["W1"].astype(bf16)
    w2 = params["W2"].astype(bf16)

    # k/v are only consumed through bf16 matmuls -> pre-cast to halve their DMA.
    k = k.astype(bf16)
    v = v.astype(bf16)
    mask2 = jnp.broadcast_to(mask, (1, 1, S, S)).reshape(S, S).astype(jnp.float32)

    def act_spec():
        return pl.BlockSpec((b_blk, S, D), lambda g: (g, 0, 0))

    def whole_vmem():
        # Grid-invariant operand: whole array resident in VMEM, not pipelined
        # (avoids double-buffering the weight set).
        return pl.BlockSpec(memory_space=pltpu.MemorySpace.VMEM)

    kernel = functools.partial(
        _encoder_layer_kernel,
        b_blk=b_blk, seq=S, heads=heads, depth=depth, eps=eps)

    return pl.pallas_call(
        kernel,
        out_shape=jax.ShapeDtypeStruct((B, S, D), jnp.float32),
        grid=grid,
        in_specs=[
            act_spec(), act_spec(), act_spec(),      # q (f32), k (bf16), v (bf16)
            whole_vmem(),                            # mask (S, S)
            whole_vmem(), whole_vmem(), whole_vmem(), whole_vmem(),  # Wq Wk Wv Wo
            whole_vmem(), whole_vmem(), whole_vmem(), whole_vmem(),  # LN1/LN2 g,b
            whole_vmem(), whole_vmem(),              # W1, b1
            whole_vmem(), whole_vmem(),              # W2, b2
        ],
        out_specs=act_spec(),
        compiler_params=pltpu.CompilerParams(
            dimension_semantics=("parallel",),
            vmem_limit_bytes=budget),
    )(q, k, v, mask2,
      wq, wk, wv, wo,
      params["ln1_g"], params["ln1_b"], params["ln2_g"], params["ln2_b"],
      w1, params["b1"], w2, params["b2"])


# ---------------------------------------------------------------------------
# pure-JAX f32 reference (mirrors the PyTorch forward exactly, eval mode)
# ---------------------------------------------------------------------------
def encoder_layer_ref(q, k, v, mask, params, *, heads):
    B, S, D = q.shape
    depth = D // heads
    norm = math.sqrt(depth)
    qp = q @ params["Q"]
    kp = k @ params["K"]
    vp = v @ params["V"]
    qp = qp.reshape(B, S, heads, depth).transpose(0, 2, 1, 3)
    kp = kp.reshape(B, S, heads, depth).transpose(0, 2, 3, 1)
    vp = vp.reshape(B, S, heads, depth).transpose(0, 2, 1, 3)
    g = (qp @ kp) / norm
    g = g - mask * 1e9
    A = jax.nn.softmax(g, axis=-1)
    att = (A @ vp).transpose(0, 2, 1, 3).reshape(B, S, D)
    att = att @ params["O"]
    x = att + q

    def ln(x, gamma, beta):
        mu = jnp.mean(x, axis=-1, keepdims=True)
        var = jnp.mean((x - mu) ** 2, axis=-1, keepdims=True)
        return (x - mu) / jnp.sqrt(var + 1e-5) * gamma + beta

    x = ln(x, params["ln1_g"][0], params["ln1_b"][0])
    d = jax.nn.relu(x @ params["W1"] + params["b1"][0])
    d = d @ params["W2"] + params["b2"][0]
    x = d + x
    x = ln(x, params["ln2_g"][0], params["ln2_b"][0])
    return x


def init_params(key, dim):
    ks = jax.random.split(key, 8)

    def xavier(k, fan_in, fan_out, shape):
        lim = math.sqrt(6.0 / (fan_in + fan_out))
        return jax.random.uniform(k, shape, jnp.float32, -lim, lim)

    def kaiming(k, fan_in, shape):
        lim = math.sqrt(6.0 / fan_in)  # kaiming_uniform, relu gain
        return jax.random.uniform(k, shape, jnp.float32, -lim, lim)

    hidden = dim * 4
    return {
        "Q": xavier(ks[0], dim, dim, (dim, dim)),
        "K": xavier(ks[1], dim, dim, (dim, dim)),
        "V": xavier(ks[2], dim, dim, (dim, dim)),
        "O": xavier(ks[3], dim, dim, (dim, dim)),
        "ln1_g": jnp.ones((1, dim), jnp.float32),
        "ln1_b": jnp.zeros((1, dim), jnp.float32),
        "ln2_g": jnp.ones((1, dim), jnp.float32),
        "ln2_b": jnp.zeros((1, dim), jnp.float32),
        # stored pre-transposed: x @ W1, x @ W2
        "W1": kaiming(ks[4], dim, (dim, hidden)),
        "b1": jax.random.uniform(ks[5], (1, hidden), jnp.float32,
                                 -1.0 / math.sqrt(dim), 1.0 / math.sqrt(dim)),
        "W2": xavier(ks[6], hidden, dim, (hidden, dim)),
        "b2": jax.random.uniform(ks[7], (1, dim), jnp.float32,
                                 -1.0 / math.sqrt(hidden), 1.0 / math.sqrt(hidden)),
    }


if __name__ == "__main__":
    B, S, dim, heads = 2, 8, 32, 4
    key = jax.random.PRNGKey(0)
    kq, kk, kv, kp = jax.random.split(key, 4)

    q = jax.random.normal(kq, (B, S, dim), jnp.float32)
    k = jax.random.normal(kk, (B, S, dim), jnp.float32)
    v = jax.random.normal(kv, (B, S, dim), jnp.float32)
    # causal-style float mask: 1.0 where attention is disallowed
    mask = jnp.triu(jnp.ones((S, S), jnp.float32), k=1)[None, None, :, :]

    params = init_params(kp, dim)

    out = encoder_layer(q, k, v, mask, params, heads=heads)
    out = jax.block_until_ready(out)

    ref = encoder_layer_ref(q, k, v, mask, params, heads=heads)
    assert out.shape == (B, S, dim)
    err = jnp.max(jnp.abs(out - ref))
    # bf16 matmul inputs (f32 accumulation) + approx reciprocal vs f32 reference.
    assert jnp.allclose(out, ref, atol=5e-2, rtol=5e-2), f"max err {err}"

    print("KERNEL_OK")
</pallas_src>

<mosaic_0001>
module attributes {stable_mosaic.version = 11 : i64} {
  func.func @_encoder_layer_kernel(%arg0: i32, %arg1: memref<1x8x32xf32, #tpu.memory_space<vmem>>, %arg2: memref<1x8x32xbf16, #tpu.memory_space<vmem>>, %arg3: memref<1x8x32xbf16, #tpu.memory_space<vmem>>, %arg4: memref<8x8xf32, #tpu.memory_space<vmem>>, %arg5: memref<4x32x8xbf16, #tpu.memory_space<vmem>>, %arg6: memref<4x32x8xbf16, #tpu.memory_space<vmem>>, %arg7: memref<4x32x8xbf16, #tpu.memory_space<vmem>>, %arg8: memref<4x8x32xbf16, #tpu.memory_space<vmem>>, %arg9: memref<1x32xf32, #tpu.memory_space<vmem>>, %arg10: memref<1x32xf32, #tpu.memory_space<vmem>>, %arg11: memref<1x32xf32, #tpu.memory_space<vmem>>, %arg12: memref<1x32xf32, #tpu.memory_space<vmem>>, %arg13: memref<32x128xbf16, #tpu.memory_space<vmem>>, %arg14: memref<1x128xf32, #tpu.memory_space<vmem>>, %arg15: memref<128x32xbf16, #tpu.memory_space<vmem>>, %arg16: memref<1x32xf32, #tpu.memory_space<vmem>>, %arg17: memref<1x8x32xf32, #tpu.memory_space<vmem>>) attributes {dimension_semantics = [#tpu.dimension_semantics<parallel>], iteration_bounds = array<i64: 2>, scalar_prefetch = 0 : i64, scratch_operands = 0 : i64, tpu.core_type = #tpu.core_type<tc>, window_params = [{transform_indices = @transform_0, window_bounds = array<i64: 1, 8, 32>}, {transform_indices = @transform_1, window_bounds = array<i64: 1, 8, 32>}, {transform_indices = @transform_2, window_bounds = array<i64: 1, 8, 32>}, {pipeline_mode = #tpu.pipeline_mode<synchronous>, transform_indices = @transform_3, window_bounds = array<i64: 8, 8>}, {pipeline_mode = #tpu.pipeline_mode<synchronous>, transform_indices = @transform_4, window_bounds = array<i64: 4, 32, 8>}, {pipeline_mode = #tpu.pipeline_mode<synchronous>, transform_indices = @transform_5, window_bounds = array<i64: 4, 32, 8>}, {pipeline_mode = #tpu.pipeline_mode<synchronous>, transform_indices = @transform_6, window_bounds = array<i64: 4, 32, 8>}, {pipeline_mode = #tpu.pipeline_mode<synchronous>, transform_indices = @transform_7, window_bounds = array<i64: 4, 8, 32>}, {pipeline_mode = #tpu.pipeline_mode<synchronous>, transform_indices = @transform_8, window_bounds = array<i64: 1, 32>}, {pipeline_mode = #tpu.pipeline_mode<synchronous>, transform_indices = @transform_9, window_bounds = array<i64: 1, 32>}, {pipeline_mode = #tpu.pipeline_mode<synchronous>, transform_indices = @transform_10, window_bounds = array<i64: 1, 32>}, {pipeline_mode = #tpu.pipeline_mode<synchronous>, transform_indices = @transform_11, window_bounds = array<i64: 1, 32>}, {pipeline_mode = #tpu.pipeline_mode<synchronous>, transform_indices = @transform_12, window_bounds = array<i64: 32, 128>}, {pipeline_mode = #tpu.pipeline_mode<synchronous>, transform_indices = @transform_13, window_bounds = array<i64: 1, 128>}, {pipeline_mode = #tpu.pipeline_mode<synchronous>, transform_indices = @transform_14, window_bounds = array<i64: 128, 32>}, {pipeline_mode = #tpu.pipeline_mode<synchronous>, transform_indices = @transform_15, window_bounds = array<i64: 1, 32>}, {transform_indices = @transform_16, window_bounds = array<i64: 1, 8, 32>}]} {
    %c0 = arith.constant 0 : index
    %c0_0 = arith.constant 0 : index
    %c0_1 = arith.constant 0 : index
    %0 = vector.load %arg1[%c0, %c0_0, %c0_1] : memref<1x8x32xf32, #tpu.memory_space<vmem>>, vector<1x8x32xf32>
    %1 = vector.shape_cast %0 : vector<1x8x32xf32> to vector<8x32xf32>
    %c0_2 = arith.constant 0 : index
    %c0_3 = arith.constant 0 : index
    %c0_4 = arith.constant 0 : index
    %2 = vector.load %arg2[%c0_2, %c0_3, %c0_4] : memref<1x8x32xbf16, #tpu.memory_space<vmem>>, vector<1x8x32xbf16>
    %3 = vector.shape_cast %2 : vector<1x8x32xbf16> to vector<8x32xbf16>
    %c0_5 = arith.constant 0 : index
    %c0_6 = arith.constant 0 : index
    %c0_7 = arith.constant 0 : index
    %4 = vector.load %arg3[%c0_5, %c0_6, %c0_7] : memref<1x8x32xbf16, #tpu.memory_space<vmem>>, vector<1x8x32xbf16>
    %5 = vector.shape_cast %4 : vector<1x8x32xbf16> to vector<8x32xbf16>
    %6 = arith.truncf %1 : vector<8x32xf32> to vector<8x32xbf16>
    %7 = vector.shape_cast %6 : vector<8x32xbf16> to vector<1x8x32xbf16>
    %8 = vector.shape_cast %7 : vector<1x8x32xbf16> to vector<1x8x32xbf16>
    %9 = vector.broadcast %8 : vector<1x8x32xbf16> to vector<4x8x32xbf16>
    %10 = vector.shape_cast %3 : vector<8x32xbf16> to vector<1x8x32xbf16>
    %11 = vector.shape_cast %10 : vector<1x8x32xbf16> to vector<1x8x32xbf16>
    %12 = vector.broadcast %11 : vector<1x8x32xbf16> to vector<4x8x32xbf16>
    %13 = vector.shape_cast %5 : vector<8x32xbf16> to vector<1x8x32xbf16>
    %14 = vector.shape_cast %13 : vector<1x8x32xbf16> to vector<1x8x32xbf16>
    %15 = vector.broadcast %14 : vector<1x8x32xbf16> to vector<4x8x32xbf16>
    %c0_8 = arith.constant 0 : index
    %c0_9 = arith.constant 0 : index
    %c0_10 = arith.constant 0 : index
    %16 = vector.load %arg5[%c0_8, %c0_9, %c0_10] : memref<4x32x8xbf16, #tpu.memory_space<vmem>>, vector<4x32x8xbf16>
    "tpu.trace_start"() <{level = 10 : i32, message = "hrD,hDd->hrd"}> : () -> ()
    %cst = arith.constant dense<0.000000e+00> : vector<4x8x8xf32>
    %17 = tpu.matmul %9, %16, %cst {dimension_numbers = #tpu.dot_dimension_numbers<[2], [1], [1], [2], [0, 0, 0, 1, 1, 2], [0], [0]>} : vector<4x8x32xbf16>, vector<4x32x8xbf16>, vector<4x8x8xf32> -> vector<4x8x8xf32>
    "tpu.trace_stop"() : () -> ()
    %c0_11 = arith.constant 0 : index
    %c0_12 = arith.constant 0 : index
    %c0_13 = arith.constant 0 : index
    %18 = vector.load %arg6[%c0_11, %c0_12, %c0_13] : memref<4x32x8xbf16, #tpu.memory_space<vmem>>, vector<4x32x8xbf16>
    "tpu.trace_start"() <{level = 10 : i32, message = "hrD,hDd->hrd"}> : () -> ()
    %cst_14 = arith.constant dense<0.000000e+00> : vector<4x8x8xf32>
    %19 = tpu.matmul %12, %18, %cst_14 {dimension_numbers = #tpu.dot_dimension_numbers<[2], [1], [1], [2], [0, 0, 0, 1, 1, 2], [0], [0]>} : vector<4x8x32xbf16>, vector<4x32x8xbf16>, vector<4x8x8xf32> -> vector<4x8x8xf32>
    "tpu.trace_stop"() : () -> ()
    %c0_15 = arith.constant 0 : index
    %c0_16 = arith.constant 0 : index
    %c0_17 = arith.constant 0 : index
    %20 = vector.load %arg7[%c0_15, %c0_16, %c0_17] : memref<4x32x8xbf16, #tpu.memory_space<vmem>>, vector<4x32x8xbf16>
    "tpu.trace_start"() <{level = 10 : i32, message = "hrD,hDd->hrd"}> : () -> ()
    %cst_18 = arith.constant dense<0.000000e+00> : vector<4x8x8xf32>
    %21 = tpu.matmul %15, %20, %cst_18 {dimension_numbers = #tpu.dot_dimension_numbers<[2], [1], [1], [2], [0, 0, 0, 1, 1, 2], [0], [0]>} : vector<4x8x32xbf16>, vector<4x32x8xbf16>, vector<4x8x8xf32> -> vector<4x8x8xf32>
    "tpu.trace_stop"() : () -> ()
    %cst_19 = arith.constant 0.353553385 : f32
    %22 = vector.broadcast %cst_19 : f32 to vector<4x8x8xf32>
    %23 = arith.mulf %17, %22 : vector<4x8x8xf32>
    %24 = arith.truncf %23 : vector<4x8x8xf32> to vector<4x8x8xbf16>
    %25 = arith.truncf %19 : vector<4x8x8xf32> to vector<4x8x8xbf16>
    %26 = arith.truncf %21 : vector<4x8x8xf32> to vector<4x8x8xbf16>
    %c0_20 = arith.constant 0 : index
    %c0_21 = arith.constant 0 : index
    %27 = vector.load %arg4[%c0_20, %c0_21] : memref<8x8xf32, #tpu.memory_space<vmem>>, vector<8x8xf32>
    %cst_22 = arith.constant -1.000000e+09 : f32
    %28 = vector.broadcast %cst_22 : f32 to vector<8x8xf32>
    %29 = arith.mulf %27, %28 : vector<8x8xf32>
    "tpu.trace_start"() <{level = 10 : i32, message = "nqd,nkd->nqk"}> : () -> ()
    %cst_23 = arith.constant dense<0.000000e+00> : vector<4x8x8xf32>
    %30 = tpu.matmul %24, %25, %cst_23 {dimension_numbers = #tpu.dot_dimension_numbers<[2], [2], [1], [1], [0, 0, 0, 1, 1, 1], [0], [0]>} : vector<4x8x8xbf16>, vector<4x8x8xbf16>, vector<4x8x8xf32> -> vector<4x8x8xf32>
    "tpu.trace_stop"() : () -> ()
    %31 = vector.shape_cast %29 : vector<8x8xf32> to vector<1x8x8xf32>
    %32 = vector.broadcast %31 : vector<1x8x8xf32> to vector<4x8x8xf32>
    %33 = arith.addf %30, %32 : vector<4x8x8xf32>
    %cst_24 = arith.constant dense<0xFF800000> : vector<4x8xf32>
    %34 = vector.multi_reduction <maximumf>, %33, %cst_24 [2] : vector<4x8x8xf32> to vector<4x8xf32>
    %35 = vector.shape_cast %34 : vector<4x8xf32> to vector<4x8x1xf32>
    %36 = vector.broadcast %35 : vector<4x8x1xf32> to vector<4x8x8xf32>
    %37 = arith.subf %33, %36 : vector<4x8x8xf32>
    %38 = math.exp %37 : vector<4x8x8xf32>
    %cst_25 = arith.constant dense<0.000000e+00> : vector<4x8xf32>
    %39 = vector.multi_reduction <add>, %38, %cst_25 [2] : vector<4x8x8xf32> to vector<4x8xf32>
    %40 = vector.shape_cast %39 : vector<4x8xf32> to vector<4x8x1xf32>
    %41 = tpu.reciprocal %40 {approx = true} : vector<4x8x1xf32> -> vector<4x8x1xf32>
    %42 = vector.broadcast %41 : vector<4x8x1xf32> to vector<4x8x8xf32>
    %43 = arith.mulf %38, %42 : vector<4x8x8xf32>
    %44 = arith.truncf %43 : vector<4x8x8xf32> to vector<4x8x8xbf16>
    "tpu.trace_start"() <{level = 10 : i32, message = "nqk,nkd->nqd"}> : () -> ()
    %cst_26 = arith.constant dense<0.000000e+00> : vector<4x8x8xf32>
    %45 = tpu.matmul %44, %26, %cst_26 {dimension_numbers = #tpu.dot_dimension_numbers<[2], [1], [1], [2], [0, 0, 0, 1, 1, 2], [0], [0]>} : vector<4x8x8xbf16>, vector<4x8x8xbf16>, vector<4x8x8xf32> -> vector<4x8x8xf32>
    "tpu.trace_stop"() : () -> ()
    %46 = arith.truncf %45 : vector<4x8x8xf32> to vector<4x8x8xbf16>
    %c0_27 = arith.constant 0 : index
    %c0_28 = arith.constant 0 : index
    %c0_29 = arith.constant 0 : index
    %47 = vector.load %arg8[%c0_27, %c0_28, %c0_29] : memref<4x8x32xbf16, #tpu.memory_space<vmem>>, vector<4x8x32xbf16>
    "tpu.trace_start"() <{level = 10 : i32, message = "hrd,hdD->hrD"}> : () -> ()
    %cst_30 = arith.constant dense<0.000000e+00> : vector<4x8x32xf32>
    %48 = tpu.matmul %46, %47, %cst_30 {dimension_numbers = #tpu.dot_dimension_numbers<[2], [1], [1], [2], [0, 0, 0, 1, 1, 2], [0], [0]>} : vector<4x8x8xbf16>, vector<4x8x32xbf16>, vector<4x8x32xf32> -> vector<4x8x32xf32>
    "tpu.trace_stop"() : () -> ()
    %cst_31 = arith.constant dense<0.000000e+00> : vector<8x32xf32>
    %49 = vector.multi_reduction <add>, %48, %cst_31 [0] : vector<4x8x32xf32> to vector<8x32xf32>
    %50 = arith.addf %49, %1 : vector<8x32xf32>
    %cst_32 = arith.constant dense<0.000000e+00> : vector<8xf32>
    %51 = vector.multi_reduction <add>, %50, %cst_32 [1] : vector<8x32xf32> to vector<8xf32>
    %52 = vector.shape_cast %51 : vector<8xf32> to vector<8x1xf32>
    %cst_33 = arith.constant 3.200000e+01 : f32
    %53 = vector.broadcast %cst_33 : f32 to vector<8x1xf32>
    %54 = arith.divf %52, %53 : vector<8x1xf32>
    %55 = vector.broadcast %54 : vector<8x1xf32> to vector<8x32xf32>
    %56 = arith.subf %50, %55 : vector<8x32xf32>
    %57 = arith.mulf %56, %56 : vector<8x32xf32>
    %cst_34 = arith.constant dense<0.000000e+00> : vector<8xf32>
    %58 = vector.multi_reduction <add>, %57, %cst_34 [1] : vector<8x32xf32> to vector<8xf32>
    %59 = vector.shape_cast %58 : vector<8xf32> to vector<8x1xf32>
    %cst_35 = arith.constant 3.200000e+01 : f32
    %60 = vector.broadcast %cst_35 : f32 to vector<8x1xf32>
    %61 = arith.divf %59, %60 : vector<8x1xf32>
    %cst_36 = arith.constant 9.99999974E-6 : f32
    %62 = vector.broadcast %cst_36 : f32 to vector<8x1xf32>
    %63 = arith.addf %61, %62 : vector<8x1xf32>
    %64 = math.rsqrt %63 : vector<8x1xf32>
    %65 = vector.broadcast %64 : vector<8x1xf32> to vector<8x32xf32>
    %66 = arith.mulf %56, %65 : vector<8x32xf32>
    %c0_37 = arith.constant 0 : index
    %c0_38 = arith.constant 0 : index
    %67 = vector.load %arg9[%c0_37, %c0_38] : memref<1x32xf32, #tpu.memory_space<vmem>>, vector<1x32xf32>
    %68 = vector.broadcast %67 : vector<1x32xf32> to vector<8x32xf32>
    %69 = arith.mulf %66, %68 : vector<8x32xf32>
    %c0_39 = arith.constant 0 : index
    %c0_40 = arith.constant 0 : index
    %70 = vector.load %arg10[%c0_39, %c0_40] : memref<1x32xf32, #tpu.memory_space<vmem>>, vector<1x32xf32>
    %71 = vector.broadcast %70 : vector<1x32xf32> to vector<8x32xf32>
    %72 = arith.addf %69, %71 : vector<8x32xf32>
    %73 = arith.truncf %72 : vector<8x32xf32> to vector<8x32xbf16>
    %c0_41 = arith.constant 0 : index
    %c0_42 = arith.constant 0 : index
    %74 = vector.load %arg13[%c0_41, %c0_42] : memref<32x128xbf16, #tpu.memory_space<vmem>>, vector<32x128xbf16>
    %cst_43 = arith.constant dense<0.000000e+00> : vector<8x128xf32>
    %75 = tpu.matmul %73, %74, %cst_43 {dimension_numbers = #tpu.dot_dimension_numbers<[1], [0], [0], [1], [0, 0, 1, 1], [], []>} : vector<8x32xbf16>, vector<32x128xbf16>, vector<8x128xf32> -> vector<8x128xf32>
    %c0_44 = arith.constant 0 : index
    %c0_45 = arith.constant 0 : index
    %76 = vector.load %arg14[%c0_44, %c0_45] : memref<1x128xf32, #tpu.memory_space<vmem>>, vector<1x128xf32>
    %77 = vector.broadcast %76 : vector<1x128xf32> to vector<8x128xf32>
    %78 = arith.addf %75, %77 : vector<8x128xf32>
    %cst_46 = arith.constant 0.000000e+00 : f32
    %79 = vector.broadcast %cst_46 : f32 to vector<8x128xf32>
    %80 = arith.maximumf %78, %79 : vector<8x128xf32>
    %81 = arith.truncf %80 : vector<8x128xf32> to vector<8x128xbf16>
    %c0_47 = arith.constant 0 : index
    %c0_48 = arith.constant 0 : index
    %82 = vector.load %arg15[%c0_47, %c0_48] : memref<128x32xbf16, #tpu.memory_space<vmem>>, vector<128x32xbf16>
    %cst_49 = arith.constant dense<0.000000e+00> : vector<8x32xf32>
    %83 = tpu.matmul %81, %82, %cst_49 {dimension_numbers = #tpu.dot_dimension_numbers<[1], [0], [0], [1], [0, 0, 1, 1], [], []>} : vector<8x128xbf16>, vector<128x32xbf16>, vector<8x32xf32> -> vector<8x32xf32>
    %c0_50 = arith.constant 0 : index
    %c0_51 = arith.constant 0 : index
    %84 = vector.load %arg16[%c0_50, %c0_51] : memref<1x32xf32, #tpu.memory_space<vmem>>, vector<1x32xf32>
    %85 = vector.broadcast %84 : vector<1x32xf32> to vector<8x32xf32>
    %86 = arith.addf %83, %85 : vector<8x32xf32>
    %87 = arith.addf %86, %72 : vector<8x32xf32>
    %cst_52 = arith.constant dense<0.000000e+00> : vector<8xf32>
    %88 = vector.multi_reduction <add>, %87, %cst_52 [1] : vector<8x32xf32> to vector<8xf32>
    %89 = vector.shape_cast %88 : vector<8xf32> to vector<8x1xf32>
    %cst_53 = arith.constant 3.200000e+01 : f32
    %90 = vector.broadcast %cst_53 : f32 to vector<8x1xf32>
    %91 = arith.divf %89, %90 : vector<8x1xf32>
    %92 = vector.broadcast %91 : vector<8x1xf32> to vector<8x32xf32>
    %93 = arith.subf %87, %92 : vector<8x32xf32>
    %94 = arith.mulf %93, %93 : vector<8x32xf32>
    %cst_54 = arith.constant dense<0.000000e+00> : vector<8xf32>
    %95 = vector.multi_reduction <add>, %94, %cst_54 [1] : vector<8x32xf32> to vector<8xf32>
    %96 = vector.shape_cast %95 : vector<8xf32> to vector<8x1xf32>
    %cst_55 = arith.constant 3.200000e+01 : f32
    %97 = vector.broadcast %cst_55 : f32 to vector<8x1xf32>
    %98 = arith.divf %96, %97 : vector<8x1xf32>
    %cst_56 = arith.constant 9.99999974E-6 : f32
    %99 = vector.broadcast %cst_56 : f32 to vector<8x1xf32>
    %100 = arith.addf %98, %99 : vector<8x1xf32>
    %101 = math.rsqrt %100 : vector<8x1xf32>
    %102 = vector.broadcast %101 : vector<8x1xf32> to vector<8x32xf32>
    %103 = arith.mulf %93, %102 : vector<8x32xf32>
    %c0_57 = arith.constant 0 : index
    %c0_58 = arith.constant 0 : index
    %104 = vector.load %arg11[%c0_57, %c0_58] : memref<1x32xf32, #tpu.memory_space<vmem>>, vector<1x32xf32>
    %105 = vector.broadcast %104 : vector<1x32xf32> to vector<8x32xf32>
    %106 = arith.mulf %103, %105 : vector<8x32xf32>
    %c0_59 = arith.constant 0 : index
    %c0_60 = arith.constant 0 : index
    %107 = vector.load %arg12[%c0_59, %c0_60] : memref<1x32xf32, #tpu.memory_space<vmem>>, vector<1x32xf32>
    %108 = vector.broadcast %107 : vector<1x32xf32> to vector<8x32xf32>
    %109 = arith.addf %106, %108 : vector<8x32xf32>
    %110 = vector.shape_cast %109 : vector<8x32xf32> to vector<1x8x32xf32>
    %c0_61 = arith.constant 0 : index
    %c0_62 = arith.constant 0 : index
    %c0_63 = arith.constant 0 : index
    %111 = vector.load %arg17[%c0_61, %c0_62, %c0_63] : memref<1x8x32xf32, #tpu.memory_space<vmem>>, vector<1x8x32xf32>
    tpu.vector_store %arg17[%c0_61, %c0_62, %c0_63], %110 {strides = array<i32>} : memref<1x8x32xf32, #tpu.memory_space<vmem>>, vector<1x8x32xf32>,
    return
  }
  func.func @transform_0(%arg0: i32) -> (i32, i32, i32) {
    %c0_i32 = arith.constant 0 : i32
    %c0_i32_0 = arith.constant 0 : i32
    %c0_i32_1 = arith.constant 0 : i32
    return %arg0, %c0_i32, %c0_i32_0 : i32, i32, i32
  }
  func.func @transform_1(%arg0: i32) -> (i32, i32, i32) {
    %c0_i32 = arith.constant 0 : i32
    %c0_i32_0 = arith.constant 0 : i32
    %c0_i32_1 = arith.constant 0 : i32
    return %arg0, %c0_i32, %c0_i32_0 : i32, i32, i32
  }
  func.func @transform_2(%arg0: i32) -> (i32, i32, i32) {
    %c0_i32 = arith.constant 0 : i32
    %c0_i32_0 = arith.constant 0 : i32
    %c0_i32_1 = arith.constant 0 : i32
    return %arg0, %c0_i32, %c0_i32_0 : i32, i32, i32
  }
  func.func @transform_3(%arg0: i32) -> (i32, i32) {
    %c0_i32 = arith.constant 0 : i32
    %c0_i32_0 = arith.constant 0 : i32
    %c0_i32_1 = arith.constant 0 : i32
    return %c0_i32, %c0_i32_0 : i32, i32
  }
  func.func @transform_4(%arg0: i32) -> (i32, i32, i32) {
    %c0_i32 = arith.constant 0 : i32
    %c0_i32_0 = arith.constant 0 : i32
    %c0_i32_1 = arith.constant 0 : i32
    %c0_i32_2 = arith.constant 0 : i32
    return %c0_i32, %c0_i32_0, %c0_i32_1 : i32, i32, i32
  }
  func.func @transform_5(%arg0: i32) -> (i32, i32, i32) {
    %c0_i32 = arith.constant 0 : i32
    %c0_i32_0 = arith.constant 0 : i32
    %c0_i32_1 = arith.constant 0 : i32
    %c0_i32_2 = arith.constant 0 : i32
    return %c0_i32, %c0_i32_0, %c0_i32_1 : i32, i32, i32
  }
  func.func @transform_6(%arg0: i32) -> (i32, i32, i32) {
    %c0_i32 = arith.constant 0 : i32
    %c0_i32_0 = arith.constant 0 : i32
    %c0_i32_1 = arith.constant 0 : i32
    %c0_i32_2 = arith.constant 0 : i32
    return %c0_i32, %c0_i32_0, %c0_i32_1 : i32, i32, i32
  }
  func.func @transform_7(%arg0: i32) -> (i32, i32, i32) {
    %c0_i32 = arith.constant 0 : i32
    %c0_i32_0 = arith.constant 0 : i32
    %c0_i32_1 = arith.constant 0 : i32
    %c0_i32_2 = arith.constant 0 : i32
    return %c0_i32, %c0_i32_0, %c0_i32_1 : i32, i32, i32
  }
  func.func @transform_8(%arg0: i32) -> (i32, i32) {
    %c0_i32 = arith.constant 0 : i32
    %c0_i32_0 = arith.constant 0 : i32
    %c0_i32_1 = arith.constant 0 : i32
    return %c0_i32, %c0_i32_0 : i32, i32
  }
  func.func @transform_9(%arg0: i32) -> (i32, i32) {
    %c0_i32 = arith.constant 0 : i32
    %c0_i32_0 = arith.constant 0 : i32
    %c0_i32_1 = arith.constant 0 : i32
    return %c0_i32, %c0_i32_0 : i32, i32
  }
  func.func @transform_10(%arg0: i32) -> (i32, i32) {
    %c0_i32 = arith.constant 0 : i32
    %c0_i32_0 = arith.constant 0 : i32
    %c0_i32_1 = arith.constant 0 : i32
    return %c0_i32, %c0_i32_0 : i32, i32
  }
  func.func @transform_11(%arg0: i32) -> (i32, i32) {
    %c0_i32 = arith.constant 0 : i32
    %c0_i32_0 = arith.constant 0 : i32
    %c0_i32_1 = arith.constant 0 : i32
    return %c0_i32, %c0_i32_0 : i32, i32
  }
  func.func @transform_12(%arg0: i32) -> (i32, i32) {
    %c0_i32 = arith.constant 0 : i32
    %c0_i32_0 = arith.constant 0 : i32
    %c0_i32_1 = arith.constant 0 : i32
    return %c0_i32, %c0_i32_0 : i32, i32
  }
  func.func @transform_13(%arg0: i32) -> (i32, i32) {
    %c0_i32 = arith.constant 0 : i32
    %c0_i32_0 = arith.constant 0 : i32
    %c0_i32_1 = arith.constant 0 : i32
    return %c0_i32, %c0_i32_0 : i32, i32
  }
  func.func @transform_14(%arg0: i32) -> (i32, i32) {
    %c0_i32 = arith.constant 0 : i32
    %c0_i32_0 = arith.constant 0 : i32
    %c0_i32_1 = arith.constant 0 : i32
    return %c0_i32, %c0_i32_0 : i32, i32
  }
  func.func @transform_15(%arg0: i32) -> (i32, i32) {
    %c0_i32 = arith.constant 0 : i32
    %c0_i32_0 = arith.constant 0 : i32
    %c0_i32_1 = arith.constant 0 : i32
    return %c0_i32, %c0_i32_0 : i32, i32
  }
  func.func @transform_16(%arg0: i32) -> (i32, i32, i32) {
    %c0_i32 = arith.constant 0 : i32
    %c0_i32_0 = arith.constant 0 : i32
    %c0_i32_1 = arith.constant 0 : i32
    return %arg0, %c0_i32, %c0_i32_0 : i32, i32, i32
  }
}

</mosaic_0001>

<llo_original>
// kernel: tpu_custom_call.1
$region0: #{tpu_custom_call.1}
  #allocation0 [shape = 'u32[]', space=smem, size = 0x4, offset = 0x4, fixed_abs, tag = 'smem constant byte address 0x4 - core index']
  #allocation1 [shape = 'u32[72,128]{1,0:T(1,128)}', space=vmem, size = 0x9000, scoped, tag = 'internal scratch']
  %s0 = inlined_call_operand.vmem [shape: f32[2,8,32], index: 0, kind: input, shape index: {}]
  %s1 = inlined_call_operand.vmem [shape: bf16[2,8,32], index: 1, kind: input, shape index: {}]
  %s2 = inlined_call_operand.vmem [shape: bf16[2,8,32], index: 2, kind: input, shape index: {}]
  %s3 = inlined_call_operand.vmem [shape: f32[8,8], index: 3, kind: input, shape index: {}]
  %s4 = inlined_call_operand.vmem [shape: bf16[4,32,8], index: 4, kind: input, shape index: {}]
  %s5 = inlined_call_operand.vmem [shape: bf16[4,32,8], index: 5, kind: input, shape index: {}]
  %s6 = inlined_call_operand.vmem [shape: bf16[4,32,8], index: 6, kind: input, shape index: {}]
  %s7 = inlined_call_operand.vmem [shape: bf16[4,8,32], index: 7, kind: input, shape index: {}]
  %s8 = inlined_call_operand.vmem [shape: f32[1,32], index: 8, kind: input, shape index: {}]
  %s9 = inlined_call_operand.vmem [shape: f32[1,32], index: 9, kind: input, shape index: {}]
  %s10 = inlined_call_operand.vmem [shape: f32[1,32], index: 10, kind: input, shape index: {}]
  %s11 = inlined_call_operand.vmem [shape: f32[1,32], index: 11, kind: input, shape index: {}]
  %s12 = inlined_call_operand.vmem [shape: bf16[32,128], index: 12, kind: input, shape index: {}]
  %s13 = inlined_call_operand.vmem [shape: f32[1,128], index: 13, kind: input, shape index: {}]
  %s14 = inlined_call_operand.vmem [shape: bf16[128,32], index: 14, kind: input, shape index: {}]
  %s15 = inlined_call_operand.vmem [shape: f32[1,32], index: 15, kind: input, shape index: {}]
  %s16 = inlined_call_operand.hbm [shape: f32[2,8,32], index: 16, kind: output, shape index: {}]
  %s17 = sld [smem:[#allocation0]]
  $region97: #{tpu_custom_call.1} parent=0
    _
  %s19 = ssub.s32 1, %s17
  %s20 = scalar_select 0, %s19, %s17
  $region1: #{tpu_custom_call.1} parent=0
    #allocation2 [shape = 'u8[8192]{0}', space=vmem, size = 0x2000, scoped, tag = 'output window, operand 0']
    #allocation3 [shape = 's32[2]{0}', space=sflag, size = 0x8, scoped, tag = 'scoped memory for tpu_custom_call.1']
    %21 = vsyncpa [#allocation3], 0
    %s22 = scalar_lea.sflag [#allocation3], 1
    %23 = vsyncpa %s22, 0
    loop: start=0, step=1, limit=4
    $region2: #{tpu_custom_call.1} parent=1 // loop_pre_header
      _
    $region3: #{tpu_custom_call.1} parent=1 // loop_header
      %s25 = sphi 0, %s29
      %p26 = scmp.ge.s32.totalorder %s25, 4
      %s35 = sphi 0, %s37
      %s38 = sphi 0, %s35
      %s39 = sphi 0, %s38
      %s55 = sphi 0, %s39
      %s61 = sphi 0, %s63
      %s64 = sphi 0, %s61
      %s65 = sphi 0, %s64
      %s81 = sphi 0, %s65
      %s87 = sphi 0, %s89
      %s90 = sphi 0, %s87
      %s91 = sphi 0, %s90
      %s107 = sphi 0, %s91
      %s111 = sphi 0, %s111
      %s113 = sphi 0, %s111
      %s114 = sphi 0, %s113
      %s128 = sphi 0, %s114
      %s132 = sphi 0, %s132
      %s134 = sphi 0, %s132
      %s135 = sphi 0, %s134
      %s149 = sphi 0, %s135
      %s153 = sphi 0, %s153
      %s155 = sphi 0, %s153
      %s156 = sphi 0, %s155
      %s170 = sphi 0, %s156
      %s174 = sphi 0, %s174
      %s176 = sphi 0, %s174
      %s177 = sphi 0, %s176
      %s191 = sphi 0, %s177
      %s195 = sphi 0, %s195
      %s197 = sphi 0, %s195
      %s198 = sphi 0, %s197
      %s212 = sphi 0, %s198
      %s216 = sphi 0, %s216
      %s218 = sphi 0, %s216
      %s219 = sphi 0, %s218
      %s233 = sphi 0, %s219
      %s237 = sphi 0, %s237
      %s239 = sphi 0, %s237
      %s240 = sphi 0, %s239
      %s254 = sphi 0, %s240
      %s258 = sphi 0, %s258
      %s260 = sphi 0, %s258
      %s261 = sphi 0, %s260
      %s275 = sphi 0, %s261
      %s279 = sphi 0, %s279
      %s281 = sphi 0, %s279
      %s282 = sphi 0, %s281
      %s296 = sphi 0, %s282
      %s300 = sphi 0, %s300
      %s302 = sphi 0, %s300
      %s303 = sphi 0, %s302
      %s317 = sphi 0, %s303
      %s321 = sphi 0, %s321
      %s323 = sphi 0, %s321
      %s324 = sphi 0, %s323
      %s338 = sphi 0, %s324
      %s342 = sphi 0, %s342
      %s344 = sphi 0, %s342
      %s345 = sphi 0, %s344
      %s359 = sphi 0, %s345
      %s363 = sphi 0, %s363
      %s365 = sphi 0, %s363
      %s366 = sphi 0, %s365
      %s380 = sphi 0, %s366
      %s386 = sphi 0, %s388
      %s389 = sphi 0, %s386
      %s390 = sphi 0, %s389
      %s406 = sphi 0, %s390
    $region4: #{tpu_custom_call.1} parent=1 // loop_header_branch
      %28 = sbr.rel (%p26) target = $region8
    $region5: #{tpu_custom_call.1} parent=1 // loop_body
      %s30 = ssub.s32 %s25, 1
      %s31 = ssub.s32 %s25, 2
      %s32 = sadd.s32 %s25, 1
      %s33 = ssub.s32 %s25, %s32
      %p34 = scmp.eq.s32.totalorder %s33, 0
      %s36 = sadd.s32 %s35, 1
      %s37 = scalar_select %p34, %s35, %s36
      %p40 = pneg %p34
      %p41 = scmp.eq.s32.totalorder %s25, 1
      %p42 = por %p40, %p41
      %p43 = scmp.ne.s32.totalorder %s35, %s38
      %p44 = scmp.eq.s32.totalorder %s25, 0
      %p45 = por %p43, %p44
      %p46 = scmp.ne.s32.totalorder %s35, %s38
      %p47 = scmp.eq.s32.totalorder %s30, 1
      %p48 = por %p46, %p47
      %p49 = scmp.ne.s32.totalorder %s38, %s39
      %p50 = scmp.eq.s32.totalorder %s30, 0
      %p51 = por %p49, %p50
      %p52 = scmp.ne.s32.totalorder %s38, %s39
      %p53 = scmp.eq.s32.totalorder %s31, 1
      %p54 = por %p52, %p53
      %p56 = scmp.ne.s32.totalorder %s39, %s55
      %p57 = scmp.eq.s32.totalorder %s31, 0
      %p58 = por %p56, %p57
      %s59 = ssub.s32 %s25, %s32
      %p60 = scmp.eq.s32.totalorder %s59, 0
      %s62 = sadd.s32 %s61, 1
      %s63 = scalar_select %p60, %s61, %s62
      %p66 = pneg %p60
      %p67 = scmp.eq.s32.totalorder %s25, 1
      %p68 = por %p66, %p67
      %p69 = scmp.ne.s32.totalorder %s61, %s64
      %p70 = scmp.eq.s32.totalorder %s25, 0
      %p71 = por %p69, %p70
      %p72 = scmp.ne.s32.totalorder %s61, %s64
      %p73 = scmp.eq.s32.totalorder %s30, 1
      %p74 = por %p72, %p73
      %p75 = scmp.ne.s32.totalorder %s64, %s65
      %p76 = scmp.eq.s32.totalorder %s30, 0
      %p77 = por %p75, %p76
      %p78 = scmp.ne.s32.totalorder %s64, %s65
      %p79 = scmp.eq.s32.totalorder %s31, 1
      %p80 = por %p78, %p79
      %p82 = scmp.ne.s32.totalorder %s65, %s81
      %p83 = scmp.eq.s32.totalorder %s31, 0
      %p84 = por %p82, %p83
      %s85 = ssub.s32 %s25, %s32
      %p86 = scmp.eq.s32.totalorder %s85, 0
      %s88 = sadd.s32 %s87, 1
      %s89 = scalar_select %p86, %s87, %s88
      %p92 = pneg %p86
      %p93 = scmp.eq.s32.totalorder %s25, 1
      %p94 = por %p92, %p93
      %p95 = scmp.ne.s32.totalorder %s87, %s90
      %p96 = scmp.eq.s32.totalorder %s25, 0
      %p97 = por %p95, %p96
      %p98 = scmp.ne.s32.totalorder %s87, %s90
      %p99 = scmp.eq.s32.totalorder %s30, 1
      %p100 = por %p98, %p99
      %p101 = scmp.ne.s32.totalorder %s90, %s91
      %p102 = scmp.eq.s32.totalorder %s30, 0
      %p103 = por %p101, %p102
      %p104 = scmp.ne.s32.totalorder %s90, %s91
      %p105 = scmp.eq.s32.totalorder %s31, 1
      %p106 = por %p104, %p105
      %p108 = scmp.ne.s32.totalorder %s91, %s107
      %p109 = scmp.eq.s32.totalorder %s31, 0
      %p110 = por %p108, %p109
      %s112 = sadd.s32 %s111, 1
      %p115 = scmp.eq.s32.totalorder %s25, 1
      %p116 = scmp.ne.s32.totalorder %s111, %s113
      %p117 = scmp.eq.s32.totalorder %s25, 0
      %p118 = por %p116, %p117
      %p119 = scmp.ne.s32.totalorder %s111, %s113
      %p120 = scmp.eq.s32.totalorder %s30, 1
      %p121 = por %p119, %p120
      %p122 = scmp.ne.s32.totalorder %s113, %s114
      %p123 = scmp.eq.s32.totalorder %s30, 0
      %p124 = por %p122, %p123
      %p125 = scmp.ne.s32.totalorder %s113, %s114
      %p126 = scmp.eq.s32.totalorder %s31, 1
      %p127 = por %p125, %p126
      %p129 = scmp.ne.s32.totalorder %s114, %s128
      %p130 = scmp.eq.s32.totalorder %s31, 0
      %p131 = por %p129, %p130
      %s133 = sadd.s32 %s132, 1
      %p136 = scmp.eq.s32.totalorder %s25, 1
      %p137 = scmp.ne.s32.totalorder %s132, %s134
      %p138 = scmp.eq.s32.totalorder %s25, 0
      %p139 = por %p137, %p138
      %p140 = scmp.ne.s32.totalorder %s132, %s134
      %p141 = scmp.eq.s32.totalorder %s30, 1
      %p142 = por %p140, %p141
      %p143 = scmp.ne.s32.totalorder %s134, %s135
      %p144 = scmp.eq.s32.totalorder %s30, 0
      %p145 = por %p143, %p144
      %p146 = scmp.ne.s32.totalorder %s134, %s135
      %p147 = scmp.eq.s32.totalorder %s31, 1
      %p148 = por %p146, %p147
      %p150 = scmp.ne.s32.totalorder %s135, %s149
      %p151 = scmp.eq.s32.totalorder %s31, 0
      %p152 = por %p150, %p151
      %s154 = sadd.s32 %s153, 1
      %p157 = scmp.eq.s32.totalorder %s25, 1
      %p158 = scmp.ne.s32.totalorder %s153, %s155
      %p159 = scmp.eq.s32.totalorder %s25, 0
      %p160 = por %p158, %p159
      %p161 = scmp.ne.s32.totalorder %s153, %s155
      %p162 = scmp.eq.s32.totalorder %s30, 1
      %p163 = por %p161, %p162
      %p164 = scmp.ne.s32.totalorder %s155, %s156
      %p165 = scmp.eq.s32.totalorder %s30, 0
      %p166 = por %p164, %p165
      %p167 = scmp.ne.s32.totalorder %s155, %s156
      %p168 = scmp.eq.s32.totalorder %s31, 1
      %p169 = por %p167, %p168
      %p171 = scmp.ne.s32.totalorder %s156, %s170
      %p172 = scmp.eq.s32.totalorder %s31, 0
      %p173 = por %p171, %p172
      %s175 = sadd.s32 %s174, 1
      %p178 = scmp.eq.s32.totalorder %s25, 1
      %p179 = scmp.ne.s32.totalorder %s174, %s176
      %p180 = scmp.eq.s32.totalorder %s25, 0
      %p181 = por %p179, %p180
      %p182 = scmp.ne.s32.totalorder %s174, %s176
      %p183 = scmp.eq.s32.totalorder %s30, 1
      %p184 = por %p182, %p183
      %p185 = scmp.ne.s32.totalorder %s176, %s177
      %p186 = scmp.eq.s32.totalorder %s30, 0
      %p187 = por %p185, %p186
      %p188 = scmp.ne.s32.totalorder %s176, %s177
      %p189 = scmp.eq.s32.totalorder %s31, 1
      %p190 = por %p188, %p189
      %p192 = scmp.ne.s32.totalorder %s177, %s191
      %p193 = scmp.eq.s32.totalorder %s31, 0
      %p194 = por %p192, %p193
      %s196 = sadd.s32 %s195, 1
      %p199 = scmp.eq.s32.totalorder %s25, 1
      %p200 = scmp.ne.s32.totalorder %s195, %s197
      %p201 = scmp.eq.s32.totalorder %s25, 0
      %p202 = por %p200, %p201
      %p203 = scmp.ne.s32.totalorder %s195, %s197
      %p204 = scmp.eq.s32.totalorder %s30, 1
      %p205 = por %p203, %p204
      %p206 = scmp.ne.s32.totalorder %s197, %s198
      %p207 = scmp.eq.s32.totalorder %s30, 0
      %p208 = por %p206, %p207
      %p209 = scmp.ne.s32.totalorder %s197, %s198
      %p210 = scmp.eq.s32.totalorder %s31, 1
      %p211 = por %p209, %p210
      %p213 = scmp.ne.s32.totalorder %s198, %s212
      %p214 = scmp.eq.s32.totalorder %s31, 0
      %p215 = por %p213, %p214
      %s217 = sadd.s32 %s216, 1
      %p220 = scmp.eq.s32.totalorder %s25, 1
      %p221 = scmp.ne.s32.totalorder %s216, %s218
      %p222 = scmp.eq.s32.totalorder %s25, 0
      %p223 = por %p221, %p222
      %p224 = scmp.ne.s32.totalorder %s216, %s218
      %p225 = scmp.eq.s32.totalorder %s30, 1
      %p226 = por %p224, %p225
      %p227 = scmp.ne.s32.totalorder %s218, %s219
      %p228 = scmp.eq.s32.totalorder %s30, 0
      %p229 = por %p227, %p228
      %p230 = scmp.ne.s32.totalorder %s218, %s219
      %p231 = scmp.eq.s32.totalorder %s31, 1
      %p232 = por %p230, %p231
      %p234 = scmp.ne.s32.totalorder %s219, %s233
      %p235 = scmp.eq.s32.totalorder %s31, 0
      %p236 = por %p234, %p235
      %s238 = sadd.s32 %s237, 1
      %p241 = scmp.eq.s32.totalorder %s25, 1
      %p242 = scmp.ne.s32.totalorder %s237, %s239
      %p243 = scmp.eq.s32.totalorder %s25, 0
      %p244 = por %p242, %p243
      %p245 = scmp.ne.s32.totalorder %s237, %s239
      %p246 = scmp.eq.s32.totalorder %s30, 1
      %p247 = por %p245, %p246
      %p248 = scmp.ne.s32.totalorder %s239, %s240
      %p249 = scmp.eq.s32.totalorder %s30, 0
      %p250 = por %p248, %p249
      %p251 = scmp.ne.s32.totalorder %s239, %s240
      %p252 = scmp.eq.s32.totalorder %s31, 1
      %p253 = por %p251, %p252
      %p255 = scmp.ne.s32.totalorder %s240, %s254
      %p256 = scmp.eq.s32.totalorder %s31, 0
      %p257 = por %p255, %p256
      %s259 = sadd.s32 %s258, 1
      %p262 = scmp.eq.s32.totalorder %s25, 1
      %p263 = scmp.ne.s32.totalorder %s258, %s260
      %p264 = scmp.eq.s32.totalorder %s25, 0
      %p265 = por %p263, %p264
      %p266 = scmp.ne.s32.totalorder %s258, %s260
      %p267 = scmp.eq.s32.totalorder %s30, 1
      %p268 = por %p266, %p267
      %p269 = scmp.ne.s32.totalorder %s260, %s261
      %p270 = scmp.eq.s32.totalorder %s30, 0
      %p271 = por %p269, %p270
      %p272 = scmp.ne.s32.totalorder %s260, %s261
      %p273 = scmp.eq.s32.totalorder %s31, 1
      %p274 = por %p272, %p273
      %p276 = scmp.ne.s32.totalorder %s261, %s275
      %p277 = scmp.eq.s32.totalorder %s31, 0
      %p278 = por %p276, %p277
      %s280 = sadd.s32 %s279, 1
      %p283 = scmp.eq.s32.totalorder %s25, 1
      %p284 = scmp.ne.s32.totalorder %s279, %s281
      %p285 = scmp.eq.s32.totalorder %s25, 0
      %p286 = por %p284, %p285
      %p287 = scmp.ne.s32.totalorder %s279, %s281
      %p288 = scmp.eq.s32.totalorder %s30, 1
      %p289 = por %p287, %p288
      %p290 = scmp.ne.s32.totalorder %s281, %s282
      %p291 = scmp.eq.s32.totalorder %s30, 0
      %p292 = por %p290, %p291
      %p293 = scmp.ne.s32.totalorder %s281, %s282
      %p294 = scmp.eq.s32.totalorder %s31, 1
      %p295 = por %p293, %p294
      %p297 = scmp.ne.s32.totalorder %s282, %s296
      %p298 = scmp.eq.s32.totalorder %s31, 0
      %p299 = por %p297, %p298
      %s301 = sadd.s32 %s300, 1
      %p304 = scmp.eq.s32.totalorder %s25, 1
      %p305 = scmp.ne.s32.totalorder %s300, %s302
      %p306 = scmp.eq.s32.totalorder %s25, 0
      %p307 = por %p305, %p306
      %p308 = scmp.ne.s32.totalorder %s300, %s302
      %p309 = scmp.eq.s32.totalorder %s30, 1
      %p310 = por %p308, %p309
      %p311 = scmp.ne.s32.totalorder %s302, %s303
      %p312 = scmp.eq.s32.totalorder %s30, 0
      %p313 = por %p311, %p312
      %p314 = scmp.ne.s32.totalorder %s302, %s303
      %p315 = scmp.eq.s32.totalorder %s31, 1
      %p316 = por %p314, %p315
      %p318 = scmp.ne.s32.totalorder %s303, %s317
      %p319 = scmp.eq.s32.totalorder %s31, 0
      %p320 = por %p318, %p319
      %s322 = sadd.s32 %s321, 1
      %p325 = scmp.eq.s32.totalorder %s25, 1
      %p326 = scmp.ne.s32.totalorder %s321, %s323
      %p327 = scmp.eq.s32.totalorder %s25, 0
      %p328 = por %p326, %p327
      %p329 = scmp.ne.s32.totalorder %s321, %s323
      %p330 = scmp.eq.s32.totalorder %s30, 1
      %p331 = por %p329, %p330
      %p332 = scmp.ne.s32.totalorder %s323, %s324
      %p333 = scmp.eq.s32.totalorder %s30, 0
      %p334 = por %p332, %p333
      %p335 = scmp.ne.s32.totalorder %s323, %s324
      %p336 = scmp.eq.s32.totalorder %s31, 1
      %p337 = por %p335, %p336
      %p339 = scmp.ne.s32.totalorder %s324, %s338
      %p340 = scmp.eq.s32.totalorder %s31, 0
      %p341 = por %p339, %p340
      %s343 = sadd.s32 %s342, 1
      %p346 = scmp.eq.s32.totalorder %s25, 1
      %p347 = scmp.ne.s32.totalorder %s342, %s344
      %p348 = scmp.eq.s32.totalorder %s25, 0
      %p349 = por %p347, %p348
      %p350 = scmp.ne.s32.totalorder %s342, %s344
      %p351 = scmp.eq.s32.totalorder %s30, 1
      %p352 = por %p350, %p351
      %p353 = scmp.ne.s32.totalorder %s344, %s345
      %p354 = scmp.eq.s32.totalorder %s30, 0
      %p355 = por %p353, %p354
      %p356 = scmp.ne.s32.totalorder %s344, %s345
      %p357 = scmp.eq.s32.totalorder %s31, 1
      %p358 = por %p356, %p357
      %p360 = scmp.ne.s32.totalorder %s345, %s359
      %p361 = scmp.eq.s32.totalorder %s31, 0
      %p362 = por %p360, %p361
      %s364 = sadd.s32 %s363, 1
      %p367 = scmp.eq.s32.totalorder %s25, 1
      %p368 = scmp.ne.s32.totalorder %s363, %s365
      %p369 = scmp.eq.s32.totalorder %s25, 0
      %p370 = por %p368, %p369
      %p371 = scmp.ne.s32.totalorder %s363, %s365
      %p372 = scmp.eq.s32.totalorder %s30, 1
      %p373 = por %p371, %p372
      %p374 = scmp.ne.s32.totalorder %s365, %s366
      %p375 = scmp.eq.s32.totalorder %s30, 0
      %p376 = por %p374, %p375
      %p377 = scmp.ne.s32.totalorder %s365, %s366
      %p378 = scmp.eq.s32.totalorder %s31, 1
      %p379 = por %p377, %p378
      %p381 = scmp.ne.s32.totalorder %s366, %s380
      %p382 = scmp.eq.s32.totalorder %s31, 0
      %p383 = por %p381, %p382
      %s384 = ssub.s32 %s25, %s32
      %p385 = scmp.eq.s32.totalorder %s384, 0
      %s387 = sadd.s32 %s386, 1
      %s388 = scalar_select %p385, %s386, %s387
      %p391 = pneg %p385
      %p392 = scmp.eq.s32.totalorder %s25, 1
      %p393 = por %p391, %p392
      %p394 = scmp.ne.s32.totalorder %s386, %s389
      %p395 = scmp.eq.s32.totalorder %s25, 0
      %p396 = por %p394, %p395
      %p397 = scmp.ne.s32.totalorder %s386, %s389
      %p398 = scmp.eq.s32.totalorder %s30, 1
      %p399 = por %p397, %p398
      %p400 = scmp.ne.s32.totalorder %s389, %s390
      %p401 = scmp.eq.s32.totalorder %s30, 0
      %p402 = por %p400, %p401
      %p403 = scmp.ne.s32.totalorder %s389, %s390
      %p404 = scmp.eq.s32.totalorder %s31, 1
      %p405 = por %p403, %p404
      %p407 = scmp.ne.s32.totalorder %s390, %s406
      %p408 = scmp.eq.s32.totalorder %s31, 0
      %p409 = por %p407, %p408
      %p410 = scmp.le.s32.totalorder 1, %s25
      %p411 = scmp.lt.s32.totalorder %s25, 3
      %p412 = pnand %p410, %p411
      %p413 = pneg %p412
      // Predicated region
      $region9: #{tpu_custom_call.1} parent=5 // pred_check
        _
      $region10: #{tpu_custom_call.1} parent=5 // pred_check_branch
        %415 = sbr.rel (%p412) target = $region12
      $region11: #{tpu_custom_call.1} parent=5 // pred_region
        %s416 = ssub.s32 %s25, 1
        // Predicated region
        $region13: #{tpu_custom_call.1} parent=11 // pred_check
          %p417 = pneg %p124
        $region14: #{tpu_custom_call.1} parent=11 // pred_check_branch
          %419 = sbr.rel (%p417) target = $region16
        $region15: #{tpu_custom_call.1} parent=11 // pred_region
          _
        $region16: #{tpu_custom_call.1} parent=11 // pred_fallthru
          _
        // Predicated region
        $region17: #{tpu_custom_call.1} parent=11 // pred_check
          %p420 = pneg %p145
        $region18: #{tpu_custom_call.1} parent=11 // pred_check_branch
          %422 = sbr.rel (%p420) target = $region20
        $region19: #{tpu_custom_call.1} parent=11 // pred_region
          _
        $region20: #{tpu_custom_call.1} parent=11 // pred_fallthru
          _
        // Predicated region
        $region21: #{tpu_custom_call.1} parent=11 // pred_check
          %p423 = pneg %p166
        $region22: #{tpu_custom_call.1} parent=11 // pred_check_branch
          %425 = sbr.rel (%p423) target = $region24
        $region23: #{tpu_custom_call.1} parent=11 // pred_region
          _
        $region24: #{tpu_custom_call.1} parent=11 // pred_fallthru
          _
        // Predicated region
        $region25: #{tpu_custom_call.1} parent=11 // pred_check
          %p426 = pneg %p187
        $region26: #{tpu_custom_call.1} parent=11 // pred_check_branch
          %428 = sbr.rel (%p426) target = $region28
        $region27: #{tpu_custom_call.1} parent=11 // pred_region
          _
        $region28: #{tpu_custom_call.1} parent=11 // pred_fallthru
          _
        // Predicated region
        $region29: #{tpu_custom_call.1} parent=11 // pred_check
          %p429 = pneg %p208
        $region30: #{tpu_custom_call.1} parent=11 // pred_check_branch
          %431 = sbr.rel (%p429) target = $region32
        $region31: #{tpu_custom_call.1} parent=11 // pred_region
          _
        $region32: #{tpu_custom_call.1} parent=11 // pred_fallthru
          _
        // Predicated region
        $region33: #{tpu_custom_call.1} parent=11 // pred_check
          %p432 = pneg %p229
        $region34: #{tpu_custom_call.1} parent=11 // pred_check_branch
          %434 = sbr.rel (%p432) target = $region36
        $region35: #{tpu_custom_call.1} parent=11 // pred_region
          _
        $region36: #{tpu_custom_call.1} parent=11 // pred_fallthru
          _
        // Predicated region
        $region37: #{tpu_custom_call.1} parent=11 // pred_check
          %p435 = pneg %p250
        $region38: #{tpu_custom_call.1} parent=11 // pred_check_branch
          %437 = sbr.rel (%p435) target = $region40
        $region39: #{tpu_custom_call.1} parent=11 // pred_region
          _
        $region40: #{tpu_custom_call.1} parent=11 // pred_fallthru
          _
        // Predicated region
        $region41: #{tpu_custom_call.1} parent=11 // pred_check
          %p438 = pneg %p271
        $region42: #{tpu_custom_call.1} parent=11 // pred_check_branch
          %440 = sbr.rel (%p438) target = $region44
        $region43: #{tpu_custom_call.1} parent=11 // pred_region
          _
        $region44: #{tpu_custom_call.1} parent=11 // pred_fallthru
          _
        // Predicated region
        $region45: #{tpu_custom_call.1} parent=11 // pred_check
          %p441 = pneg %p292
        $region46: #{tpu_custom_call.1} parent=11 // pred_check_branch
          %443 = sbr.rel (%p441) target = $region48
        $region47: #{tpu_custom_call.1} parent=11 // pred_region
          _
        $region48: #{tpu_custom_call.1} parent=11 // pred_fallthru
          _
        // Predicated region
        $region49: #{tpu_custom_call.1} parent=11 // pred_check
          %p444 = pneg %p313
        $region50: #{tpu_custom_call.1} parent=11 // pred_check_branch
          %446 = sbr.rel (%p444) target = $region52
        $region51: #{tpu_custom_call.1} parent=11 // pred_region
          _
        $region52: #{tpu_custom_call.1} parent=11 // pred_fallthru
          _
        // Predicated region
        $region53: #{tpu_custom_call.1} parent=11 // pred_check
          %p447 = pneg %p334
        $region54: #{tpu_custom_call.1} parent=11 // pred_check_branch
          %449 = sbr.rel (%p447) target = $region56
        $region55: #{tpu_custom_call.1} parent=11 // pred_region
          _
        $region56: #{tpu_custom_call.1} parent=11 // pred_fallthru
          _
        // Predicated region
        $region57: #{tpu_custom_call.1} parent=11 // pred_check
          %p450 = pneg %p355
        $region58: #{tpu_custom_call.1} parent=11 // pred_check_branch
          %452 = sbr.rel (%p450) target = $region60
        $region59: #{tpu_custom_call.1} parent=11 // pred_region
          _
        $region60: #{tpu_custom_call.1} parent=11 // pred_fallthru
          _
        // Predicated region
        $region61: #{tpu_custom_call.1} parent=11 // pred_check
          %p453 = pneg %p376
        $region62: #{tpu_custom_call.1} parent=11 // pred_check_branch
          %455 = sbr.rel (%p453) target = $region64
        $region63: #{tpu_custom_call.1} parent=11 // pred_region
          _
        $region64: #{tpu_custom_call.1} parent=11 // pred_fallthru
          _
      $region12: #{tpu_custom_call.1} parent=5 // pred_fallthru
        _
      %p456 = scmp.lt.s32.totalorder %s25, 2
      // Predicated region
      $region65: #{tpu_custom_call.1} parent=5 // pred_check
        %p457 = pneg %p456
      $region66: #{tpu_custom_call.1} parent=5 // pred_check_branch
        %459 = sbr.rel (%p457) target = $region68
      $region67: #{tpu_custom_call.1} parent=5 // pred_region
        // Predicated region
        $region69: #{tpu_custom_call.1} parent=67 // pred_check
          %p460 = pneg %p45
        $region70: #{tpu_custom_call.1} parent=67 // pred_check_branch
          %462 = sbr.rel (%p460) target = $region72
        $region71: #{tpu_custom_call.1} parent=67 // pred_region
          %p463 = scmp.lt.s32.totalorder %s25, 1
          %s464 = scalar_select %p463, %s25, 1
          %s465 = smul.addr %s464, 8
          %s466 = scalar_lea.vmem %s0, %s465
        $region72: #{tpu_custom_call.1} parent=67 // pred_fallthru
          _
        // Predicated region
        $region73: #{tpu_custom_call.1} parent=67 // pred_check
          %p467 = pneg %p71
        $region74: #{tpu_custom_call.1} parent=67 // pred_check_branch
          %469 = sbr.rel (%p467) target = $region76
        $region75: #{tpu_custom_call.1} parent=67 // pred_region
          %p470 = scmp.lt.s32.totalorder %s25, 1
          %s471 = scalar_select %p470, %s25, 1
          %s472 = smul.addr %s471, 4
          %s473 = scalar_lea.vmem %s1, %s472
        $region76: #{tpu_custom_call.1} parent=67 // pred_fallthru
          _
        // Predicated region
        $region77: #{tpu_custom_call.1} parent=67 // pred_check
          %p474 = pneg %p97
        $region78: #{tpu_custom_call.1} parent=67 // pred_check_branch
          %476 = sbr.rel (%p474) target = $region80
        $region79: #{tpu_custom_call.1} parent=67 // pred_region
          %p477 = scmp.lt.s32.totalorder %s25, 1
          %s478 = scalar_select %p477, %s25, 1
          %s479 = smul.addr %s478, 4
          %s480 = scalar_lea.vmem %s2, %s479
        $region80: #{tpu_custom_call.1} parent=67 // pred_fallthru
          _
      $region68: #{tpu_custom_call.1} parent=5 // pred_fallthru
        _
      %p481 = scmp.le.s32.totalorder 1, %s25
      %p482 = scmp.lt.s32.totalorder %s25, 3
      %p483 = pnand %p481, %p482
      %p484 = pneg %p483
      // Predicated region
      $region81: #{tpu_custom_call.1} parent=5 // pred_check
        _
      $region82: #{tpu_custom_call.1} parent=5 // pred_check_branch
        %486 = sbr.rel (%p483) target = $region84
      $region83: #{tpu_custom_call.1} parent=5 // pred_region
        %s487 = ssub.s32 %s25, 1
        %p488 = scmp.lt.s32.totalorder %s30, 1
        %s489 = scalar_select %p488, %s30, 1
        %s490 = smul.addr %s489, 8
        %s491 = scalar_lea.vmem %s0, %s490
        %p492 = pneg %p51
        %p493 = pneg %p48
        %p494 = scmp.lt.s32.totalorder %s30, 1
        %s495 = scalar_select %p494, %s30, 1
        %s496 = smul.addr %s495, 4
        %s497 = scalar_lea.vmem %s1, %s496
        %p498 = pneg %p77
        %p499 = pneg %p74
        %p500 = scmp.lt.s32.totalorder %s30, 1
        %s501 = scalar_select %p500, %s30, 1
        %s502 = smul.addr %s501, 4
        %s503 = scalar_lea.vmem %s2, %s502
        %p504 = pneg %p103
        %p505 = pneg %p100
        %p506 = pneg %p124
        %p507 = pneg %p121
        %p508 = pneg %p145
        %p509 = pneg %p142
        %p510 = pneg %p166
        %p511 = pneg %p163
        %p512 = pneg %p187
        %p513 = pneg %p184
        %p514 = pneg %p208
        %p515 = pneg %p205
        %p516 = pneg %p229
        %p517 = pneg %p226
        %p518 = pneg %p250
        %p519 = pneg %p247
        %p520 = pneg %p271
        %p521 = pneg %p268
        %p522 = pneg %p292
        %p523 = pneg %p289
        %p524 = pneg %p313
        %p525 = pneg %p310
        %p526 = pneg %p334
        %p527 = pneg %p331
        %p528 = pneg %p355
        %p529 = pneg %p352
        %p530 = pneg %p376
        %p531 = pneg %p373
        %p532 = pneg %p402
        %p533 = pneg %p399
        %s534 = sand.u32 %s389, 1
        %s535 = scalar_lea.sflag [#allocation3], %s534
        %s536 = sand.u32 %s389, 1
        %s537 = smul.addr %s536, 8
        %s538 = scalar_lea.vmem [#allocation2], %s537
        %p539 = scmp.lt.s32.totalorder %s30, 1
        %s540 = scalar_select %p539, %s30, 1
        %s541 = smul.addr %s540, 8
        %s542 = scalar_lea.vmem %s0, %s541
        %p543 = scmp.lt.s32.totalorder %s30, 1
        %s544 = scalar_select %p543, %s30, 1
        %s545 = smul.addr %s544, 4
        %s546 = scalar_lea.vmem %s1, %s545
        %p547 = scmp.lt.s32.totalorder %s30, 1
        %s548 = scalar_select %p547, %s30, 1
        %s549 = smul.addr %s548, 4
        %s550 = scalar_lea.vmem %s2, %s549
        %v552 = vld [vmem:[%s542] sm:$0xff]
        %v553 = vld [vmem:[%s546] sm:$0xf]
        %v554 = vld [vmem:[%s550] sm:$0xf]
        %v555 = vpack.c.bf16 %v552, %v552
        %v556 = vld [vmem:[%s4] sm:$0xf]
        %v557 = vld [vmem:[%s4 + $0x4] sm:$0xf]
        %v558 = vld [vmem:[%s4 + $0x8] sm:$0xf]
        %v559 = vld [vmem:[%s4 + $0xc] sm:$0xf]
        %v560 = vld [vmem:[%s4 + $0x10] sm:$0xf]
        %v561 = vld [vmem:[%s4 + $0x14] sm:$0xf]
        %v562 = vld [vmem:[%s4 + $0x18] sm:$0xf]
        %v563 = vld [vmem:[%s4 + $0x1c] sm:$0xf]
        %v564 = vld [vmem:[%s4 + $0x20] sm:$0xf]
        %v565 = vld [vmem:[%s4 + $0x24] sm:$0xf]
        %v566 = vld [vmem:[%s4 + $0x28] sm:$0xf]
        %v567 = vld [vmem:[%s4 + $0x2c] sm:$0xf]
        %v568 = vld [vmem:[%s4 + $0x30] sm:$0xf]
        %v569 = vld [vmem:[%s4 + $0x34] sm:$0xf]
        %v570 = vld [vmem:[%s4 + $0x38] sm:$0xf]
        %v571 = vld [vmem:[%s4 + $0x3c] sm:$0xf]
        %v576 = vunpack.c.l.b16 %v556
        %v577 = vunpack.c.l.b16 %v557
        %v578 = vunpack.c.l.b16 %v558
        %v579 = vunpack.c.l.b16 %v559
        %v580 = vpack.c.b16 %v577, %v576
        %v581 = vpack.c.b16 %v579, %v578
        %vm584 = vcmask 261120
        %v586 = vsel %vm584, %v555, 0
        %588 = vmatpush.bf16.msra.mxu0 0
        %589 = vmatpush.bf16.msra.mxu0 0
        %590 = vmatpush.bf16.msra.mxu0 0
        %591 = vmatpush.bf16.msra.mxu0 0
        %592 = vmatpush.bf16.msra.mxu0 0
        %593 = vmatpush.bf16.msra.mxu0 0
        %594 = vmatpush.bf16.msra.mxu0 %v581
        %595 = vmatpush.bf16.msra.mxu0 %v580
        %596 = vmatmul.bf16.gmra.mxu0 %v586
        %v597 = vpop.f32.mrf.mxu0
        %v598 = vadd.f32 0.0, %v597
        %v599 = vpop.f32.mrf.mxu0
        %600 = vdwg.mxu0
        %v605 = vunpack.c.l.b16 %v560
        %v606 = vunpack.c.l.b16 %v561
        %v607 = vunpack.c.l.b16 %v562
        %v608 = vunpack.c.l.b16 %v563
        %v609 = vpack.c.b16 %v606, %v605
        %v610 = vpack.c.b16 %v608, %v607
        %613 = vmatpush.bf16.msra.mxu0 0
        %614 = vmatpush.bf16.msra.mxu0 0
        %615 = vmatpush.bf16.msra.mxu0 0
        %616 = vmatpush.bf16.msra.mxu0 0
        %617 = vmatpush.bf16.msra.mxu0 0
        %618 = vmatpush.bf16.msra.mxu0 0
        %619 = vmatpush.bf16.msra.mxu0 %v610
        %620 = vmatpush.bf16.msra.mxu0 %v609
        %621 = vmatmul.bf16.gmra.mxu0 %v586
        %v622 = vpop.f32.mrf.mxu0
        %v623 = vadd.f32 0.0, %v622
        %v624 = vpop.f32.mrf.mxu0
        %625 = vdwg.mxu0
        %v630 = vunpack.c.l.b16 %v564
        %v631 = vunpack.c.l.b16 %v565
        %v632 = vunpack.c.l.b16 %v566
        %v633 = vunpack.c.l.b16 %v567
        %v634 = vpack.c.b16 %v631, %v630
        %v635 = vpack.c.b16 %v633, %v632
        %638 = vmatpush.bf16.msra.mxu0 0
        %639 = vmatpush.bf16.msra.mxu0 0
        %640 = vmatpush.bf16.msra.mxu0 0
        %641 = vmatpush.bf16.msra.mxu0 0
        %642 = vmatpush.bf16.msra.mxu0 0
        %643 = vmatpush.bf16.msra.mxu0 0
        %644 = vmatpush.bf16.msra.mxu0 %v635
        %645 = vmatpush.bf16.msra.mxu0 %v634
        %646 = vmatmul.bf16.gmra.mxu0 %v586
        %v647 = vpop.f32.mrf.mxu0
        %v648 = vadd.f32 0.0, %v647
        %v649 = vpop.f32.mrf.mxu0
        %650 = vdwg.mxu0
        %v655 = vunpack.c.l.b16 %v568
        %v656 = vunpack.c.l.b16 %v569
        %v657 = vunpack.c.l.b16 %v570
        %v658 = vunpack.c.l.b16 %v571
        %v659 = vpack.c.b16 %v656, %v655
        %v660 = vpack.c.b16 %v658, %v657
        %663 = vmatpush.bf16.msra.mxu0 0
        %664 = vmatpush.bf16.msra.mxu0 0
        %665 = vmatpush.bf16.msra.mxu0 0
        %666 = vmatpush.bf16.msra.mxu0 0
        %667 = vmatpush.bf16.msra.mxu0 0
        %668 = vmatpush.bf16.msra.mxu0 0
        %669 = vmatpush.bf16.msra.mxu0 %v660
        %670 = vmatpush.bf16.msra.mxu0 %v659
        %671 = vmatmul.bf16.gmra.mxu0 %v586
        %v672 = vpop.f32.mrf.mxu0
        %v673 = vadd.f32 0.0, %v672
        %v674 = vpop.f32.mrf.mxu0
        %675 = vdwg.mxu0
        %v676 = vld [vmem:[%s5] sm:$0xf]
        %v677 = vld [vmem:[%s5 + $0x4] sm:$0xf]
        %v678 = vld [vmem:[%s5 + $0x8] sm:$0xf]
        %v679 = vld [vmem:[%s5 + $0xc] sm:$0xf]
        %v680 = vld [vmem:[%s5 + $0x10] sm:$0xf]
        %v681 = vld [vmem:[%s5 + $0x14] sm:$0xf]
        %v682 = vld [vmem:[%s5 + $0x18] sm:$0xf]
        %v683 = vld [vmem:[%s5 + $0x1c] sm:$0xf]
        %v684 = vld [vmem:[%s5 + $0x20] sm:$0xf]
        %v685 = vld [vmem:[%s5 + $0x24] sm:$0xf]
        %v686 = vld [vmem:[%s5 + $0x28] sm:$0xf]
        %v687 = vld [vmem:[%s5 + $0x2c] sm:$0xf]
        %v688 = vld [vmem:[%s5 + $0x30] sm:$0xf]
        %v689 = vld [vmem:[%s5 + $0x34] sm:$0xf]
        %v690 = vld [vmem:[%s5 + $0x38] sm:$0xf]
        %v691 = vld [vmem:[%s5 + $0x3c] sm:$0xf]
        %v696 = vunpack.c.l.b16 %v676
        %v697 = vunpack.c.l.b16 %v677
        %v698 = vunpack.c.l.b16 %v678
        %v699 = vunpack.c.l.b16 %v679
        %v700 = vpack.c.b16 %v697, %v696
        %v701 = vpack.c.b16 %v699, %v698
        %v705 = vsel %vm584, %v553, 0
        %707 = vmatpush.bf16.msra.mxu0 0
        %708 = vmatpush.bf16.msra.mxu0 0
        %709 = vmatpush.bf16.msra.mxu0 0
        %710 = vmatpush.bf16.msra.mxu0 0
        %711 = vmatpush.bf16.msra.mxu0 0
        %712 = vmatpush.bf16.msra.mxu0 0
        %713 = vmatpush.bf16.msra.mxu0 %v701
        %714 = vmatpush.bf16.msra.mxu0 %v700
        %715 = vmatmul.bf16.gmra.mxu0 %v705
        %v716 = vpop.f32.mrf.mxu0
        %v717 = vadd.f32 0.0, %v716
        %v718 = vpop.f32.mrf.mxu0
        %719 = vdwg.mxu0
        %v724 = vunpack.c.l.b16 %v680
        %v725 = vunpack.c.l.b16 %v681
        %v726 = vunpack.c.l.b16 %v682
        %v727 = vunpack.c.l.b16 %v683
        %v728 = vpack.c.b16 %v725, %v724
        %v729 = vpack.c.b16 %v727, %v726
        %732 = vmatpush.bf16.msra.mxu0 0
        %733 = vmatpush.bf16.msra.mxu0 0
        %734 = vmatpush.bf16.msra.mxu0 0
        %735 = vmatpush.bf16.msra.mxu0 0
        %736 = vmatpush.bf16.msra.mxu0 0
        %737 = vmatpush.bf16.msra.mxu0 0
        %738 = vmatpush.bf16.msra.mxu0 %v729
        %739 = vmatpush.bf16.msra.mxu0 %v728
        %740 = vmatmul.bf16.gmra.mxu0 %v705
        %v741 = vpop.f32.mrf.mxu0
        %v742 = vadd.f32 0.0, %v741
        %v743 = vpop.f32.mrf.mxu0
        %744 = vdwg.mxu0
        %v749 = vunpack.c.l.b16 %v684
        %v750 = vunpack.c.l.b16 %v685
        %v751 = vunpack.c.l.b16 %v686
        %v752 = vunpack.c.l.b16 %v687
        %v753 = vpack.c.b16 %v750, %v749
        %v754 = vpack.c.b16 %v752, %v751
        %757 = vmatpush.bf16.msra.mxu0 0
        %758 = vmatpush.bf16.msra.mxu0 0
        %759 = vmatpush.bf16.msra.mxu0 0
        %760 = vmatpush.bf16.msra.mxu0 0
        %761 = vmatpush.bf16.msra.mxu0 0
        %762 = vmatpush.bf16.msra.mxu0 0
        %763 = vmatpush.bf16.msra.mxu0 %v754
        %764 = vmatpush.bf16.msra.mxu0 %v753
        %765 = vmatmul.bf16.gmra.mxu0 %v705
        %v766 = vpop.f32.mrf.mxu0
        %v767 = vadd.f32 0.0, %v766
        %v768 = vpop.f32.mrf.mxu0
        %769 = vdwg.mxu0
        %v774 = vunpack.c.l.b16 %v688
        %v775 = vunpack.c.l.b16 %v689
        %v776 = vunpack.c.l.b16 %v690
        %v777 = vunpack.c.l.b16 %v691
        %v778 = vpack.c.b16 %v775, %v774
        %v779 = vpack.c.b16 %v777, %v776
        %782 = vmatpush.bf16.msra.mxu0 0
        %783 = vmatpush.bf16.msra.mxu0 0
        %784 = vmatpush.bf16.msra.mxu0 0
        %785 = vmatpush.bf16.msra.mxu0 0
        %786 = vmatpush.bf16.msra.mxu0 0
        %787 = vmatpush.bf16.msra.mxu0 0
        %788 = vmatpush.bf16.msra.mxu0 %v779
        %789 = vmatpush.bf16.msra.mxu0 %v778
        %790 = vmatmul.bf16.gmra.mxu0 %v705
        %v791 = vpop.f32.mrf.mxu0
        %v792 = vadd.f32 0.0, %v791
        %v793 = vpop.f32.mrf.mxu0
        %794 = vdwg.mxu0
        %v795 = vld [vmem:[%s6] sm:$0xf]
        %v796 = vld [vmem:[%s6 + $0x4] sm:$0xf]
        %v797 = vld [vmem:[%s6 + $0x8] sm:$0xf]
        %v798 = vld [vmem:[%s6 + $0xc] sm:$0xf]
        %v799 = vld [vmem:[%s6 + $0x10] sm:$0xf]
        %v800 = vld [vmem:[%s6 + $0x14] sm:$0xf]
        %v801 = vld [vmem:[%s6 + $0x18] sm:$0xf]
        %v802 = vld [vmem:[%s6 + $0x1c] sm:$0xf]
        %v803 = vld [vmem:[%s6 + $0x20] sm:$0xf]
        %v804 = vld [vmem:[%s6 + $0x24] sm:$0xf]
        %v805 = vld [vmem:[%s6 + $0x28] sm:$0xf]
        %v806 = vld [vmem:[%s6 + $0x2c] sm:$0xf]
        %v807 = vld [vmem:[%s6 + $0x30] sm:$0xf]
        %v808 = vld [vmem:[%s6 + $0x34] sm:$0xf]
        %v809 = vld [vmem:[%s6 + $0x38] sm:$0xf]
        %v810 = vld [vmem:[%s6 + $0x3c] sm:$0xf]
        %v815 = vunpack.c.l.b16 %v795
        %v816 = vunpack.c.l.b16 %v796
        %v817 = vunpack.c.l.b16 %v797
        %v818 = vunpack.c.l.b16 %v798
        %v819 = vpack.c.b16 %v816, %v815
        %v820 = vpack.c.b16 %v818, %v817
        %v824 = vsel %vm584, %v554, 0
        %826 = vmatpush.bf16.msra.mxu0 0
        %827 = vmatpush.bf16.msra.mxu0 0
        %828 = vmatpush.bf16.msra.mxu0 0
        %829 = vmatpush.bf16.msra.mxu0 0
        %830 = vmatpush.bf16.msra.mxu0 0
        %831 = vmatpush.bf16.msra.mxu0 0
        %832 = vmatpush.bf16.msra.mxu0 %v820
        %833 = vmatpush.bf16.msra.mxu0 %v819
        %834 = vmatmul.bf16.gmra.mxu0 %v824
        %v835 = vpop.f32.mrf.mxu0
        %v836 = vadd.f32 0.0, %v835
        %v837 = vpop.f32.mrf.mxu0
        %838 = vdwg.mxu0
        %v843 = vunpack.c.l.b16 %v799
        %v844 = vunpack.c.l.b16 %v800
        %v845 = vunpack.c.l.b16 %v801
        %v846 = vunpack.c.l.b16 %v802
        %v847 = vpack.c.b16 %v844, %v843
        %v848 = vpack.c.b16 %v846, %v845
        %851 = vmatpush.bf16.msra.mxu0 0
        %852 = vmatpush.bf16.msra.mxu0 0
        %853 = vmatpush.bf16.msra.mxu0 0
        %854 = vmatpush.bf16.msra.mxu0 0
        %855 = vmatpush.bf16.msra.mxu0 0
        %856 = vmatpush.bf16.msra.mxu0 0
        %857 = vmatpush.bf16.msra.mxu0 %v848
        %858 = vmatpush.bf16.msra.mxu0 %v847
        %859 = vmatmul.bf16.gmra.mxu0 %v824
        %v860 = vpop.f32.mrf.mxu0
        %v861 = vadd.f32 0.0, %v860
        %v862 = vpop.f32.mrf.mxu0
        %863 = vdwg.mxu0
        %v868 = vunpack.c.l.b16 %v803
        %v869 = vunpack.c.l.b16 %v804
        %v870 = vunpack.c.l.b16 %v805
        %v871 = vunpack.c.l.b16 %v806
        %v872 = vpack.c.b16 %v869, %v868
        %v873 = vpack.c.b16 %v871, %v870
        %876 = vmatpush.bf16.msra.mxu0 0
        %877 = vmatpush.bf16.msra.mxu0 0
        %878 = vmatpush.bf16.msra.mxu0 0
        %879 = vmatpush.bf16.msra.mxu0 0
        %880 = vmatpush.bf16.msra.mxu0 0
        %881 = vmatpush.bf16.msra.mxu0 0
        %882 = vmatpush.bf16.msra.mxu0 %v873
        %883 = vmatpush.bf16.msra.mxu0 %v872
        %884 = vmatmul.bf16.gmra.mxu0 %v824
        %v885 = vpop.f32.mrf.mxu0
        %v886 = vadd.f32 0.0, %v885
        %v887 = vpop.f32.mrf.mxu0
        %888 = vdwg.mxu0
        %v893 = vunpack.c.l.b16 %v807
        %v894 = vunpack.c.l.b16 %v808
        %v895 = vunpack.c.l.b16 %v809
        %v896 = vunpack.c.l.b16 %v810
        %v897 = vpack.c.b16 %v894, %v893
        %v898 = vpack.c.b16 %v896, %v895
        %901 = vmatpush.bf16.msra.mxu0 0
        %902 = vmatpush.bf16.msra.mxu0 0
        %903 = vmatpush.bf16.msra.mxu0 0
        %904 = vmatpush.bf16.msra.mxu0 0
        %905 = vmatpush.bf16.msra.mxu0 0
        %906 = vmatpush.bf16.msra.mxu0 0
        %907 = vmatpush.bf16.msra.mxu0 %v898
        %908 = vmatpush.bf16.msra.mxu0 %v897
        %909 = vmatmul.bf16.gmra.mxu0 %v824
        %v910 = vpop.f32.mrf.mxu0
        %v911 = vadd.f32 0.0, %v910
        %v912 = vpop.f32.mrf.mxu0
        %913 = vdwg.mxu0
        %v914 = vmul.f32 %v598, 0.35355338
        %v915 = vmul.f32 %v623, 0.35355338
        %v916 = vmul.f32 %v648, 0.35355338
        %v917 = vmul.f32 %v673, 0.35355338
        %v918 = vpack.c.bf16 %v914, %v914
        %v919 = vpack.c.bf16 %v915, %v915
        %v920 = vpack.c.bf16 %v916, %v916
        %v921 = vpack.c.bf16 %v917, %v917
        %v922 = vpack.c.bf16 %v717, %v717
        %v923 = vpack.c.bf16 %v742, %v742
        %v924 = vpack.c.bf16 %v767, %v767
        %v925 = vpack.c.bf16 %v792, %v792
        %v926 = vpack.c.bf16 %v836, %v836
        %v927 = vpack.c.bf16 %v861, %v861
        %v928 = vpack.c.bf16 %v886, %v886
        %v929 = vpack.c.bf16 %v911, %v911
        %v930 = vld [vmem:[%s3] sm:$0xff]
        %v931 = vmul.f32 %v930, -1e+09
        %vm932 = vcmask 64512
        %v934 = vsel %vm932, %v918, 0
        %v937 = vsel %vm932, %v922, 0
        %939 = vmatpush.bf16.xpose.msra.mxu0 0
        %940 = vmatpush.bf16.xpose.msra.mxu0 0
        %941 = vmatpush.bf16.xpose.msra.mxu0 0
        %942 = vmatpush.bf16.xpose.msra.mxu0 0
        %943 = vmatpush.bf16.xpose.msra.mxu0 0
        %944 = vmatpush.bf16.xpose.msra.mxu0 0
        %945 = vmatpush.bf16.xpose.msra.mxu0 0
        %946 = vmatpush.bf16.xpose.msra.mxu0 %v937
        %947 = vmatmul.bf16.gmra.mxu0 %v934
        %v948 = vpop.f32.mrf.mxu0
        %v949 = vadd.f32 %v931, %v948
        %v950 = vpop.f32.mrf.mxu0
        %951 = vdwg.mxu0
        %v953 = vsel %vm932, %v919, 0
        %v956 = vsel %vm932, %v923, 0
        %958 = vmatpush.bf16.xpose.msra.mxu0 0
        %959 = vmatpush.bf16.xpose.msra.mxu0 0
        %960 = vmatpush.bf16.xpose.msra.mxu0 0
        %961 = vmatpush.bf16.xpose.msra.mxu0 0
        %962 = vmatpush.bf16.xpose.msra.mxu0 0
        %963 = vmatpush.bf16.xpose.msra.mxu0 0
        %964 = vmatpush.bf16.xpose.msra.mxu0 0
        %965 = vmatpush.bf16.xpose.msra.mxu0 %v956
        %966 = vmatmul.bf16.gmra.mxu0 %v953
        %v967 = vpop.f32.mrf.mxu0
        %v968 = vadd.f32 %v931, %v967
        %v969 = vpop.f32.mrf.mxu0
        %970 = vdwg.mxu0
        %v972 = vsel %vm932, %v920, 0
        %v975 = vsel %vm932, %v924, 0
        %977 = vmatpush.bf16.xpose.msra.mxu0 0
        %978 = vmatpush.bf16.xpose.msra.mxu0 0
        %979 = vmatpush.bf16.xpose.msra.mxu0 0
        %980 = vmatpush.bf16.xpose.msra.mxu0 0
        %981 = vmatpush.bf16.xpose.msra.mxu0 0
        %982 = vmatpush.bf16.xpose.msra.mxu0 0
        %983 = vmatpush.bf16.xpose.msra.mxu0 0
        %984 = vmatpush.bf16.xpose.msra.mxu0 %v975
        %985 = vmatmul.bf16.gmra.mxu0 %v972
        %v986 = vpop.f32.mrf.mxu0
        %v987 = vadd.f32 %v931, %v986
        %v988 = vpop.f32.mrf.mxu0
        %989 = vdwg.mxu0
        %v991 = vsel %vm932, %v921, 0
        %v994 = vsel %vm932, %v925, 0
        %996 = vmatpush.bf16.xpose.msra.mxu0 0
        %997 = vmatpush.bf16.xpose.msra.mxu0 0
        %998 = vmatpush.bf16.xpose.msra.mxu0 0
        %999 = vmatpush.bf16.xpose.msra.mxu0 0
        %1000 = vmatpush.bf16.xpose.msra.mxu0 0
        %1001 = vmatpush.bf16.xpose.msra.mxu0 0
        %1002 = vmatpush.bf16.xpose.msra.mxu0 0
        %1003 = vmatpush.bf16.xpose.msra.mxu0 %v994
        %1004 = vmatmul.bf16.gmra.mxu0 %v991
        %v1005 = vpop.f32.mrf.mxu0
        %v1006 = vadd.f32 %v931, %v1005
        %v1007 = vpop.f32.mrf.mxu0
        %1008 = vdwg.mxu0
        %v1009 = vsel %vm932, %v949, -inf
        %1010 = vmax.xlane.f32.xlu0 %v1009
        %v1011 = vpop.xlane.xlu0 %1010
        %v1012 = vsel %vm932, %v968, -inf
        %1013 = vmax.xlane.f32.xlu0 %v1012
        %v1014 = vpop.xlane.xlu0 %1013
        %v1015 = vsel %vm932, %v987, -inf
        %1016 = vmax.xlane.f32.xlu0 %v1015
        %v1017 = vpop.xlane.xlu0 %1016
        %v1018 = vsel %vm932, %v1006, -inf
        %1019 = vmax.xlane.f32.xlu0 %v1018
        %v1020 = vpop.xlane.xlu0 %1019
        %v1021 = vsub.f32 %v949, %v1011
        %v1022 = vsub.f32 %v968, %v1014
        %v1023 = vsub.f32 %v987, %v1017
        %v1024 = vsub.f32 %v1006, %v1020
        %v1025 = vmul.f32 %v1021, 1.442695
        %v1026 = vpow.pop %v1025
        %v1027 = vmul.f32 %v1022, 1.442695
        %v1028 = vpow.pop %v1027
        %v1029 = vmul.f32 %v1023, 1.442695
        %v1030 = vpow.pop %v1029
        %v1031 = vmul.f32 %v1024, 1.442695
        %v1032 = vpow.pop %v1031
        %v1033 = vsel %vm932, %v1026, 0.0
        %1034 = vadd.xlane.f32.xlu0 %v1033
        %v1035 = vpop.xlane.xlu0 %1034
        %v1036 = vsel %vm932, %v1028, 0.0
        %1037 = vadd.xlane.f32.xlu0 %v1036
        %v1038 = vpop.xlane.xlu0 %1037
        %v1039 = vsel %vm932, %v1030, 0.0
        %1040 = vadd.xlane.f32.xlu0 %v1039
        %v1041 = vpop.xlane.xlu0 %1040
        %v1042 = vsel %vm932, %v1032, 0.0
        %1043 = vadd.xlane.f32.xlu0 %v1042
        %v1044 = vpop.xlane.xlu0 %1043
        %v1045 = vrcp.pop %v1035
        %v1046 = vrcp.pop %v1038
        %v1047 = vrcp.pop %v1041
        %v1048 = vrcp.pop %v1044
        %v1049 = vmul.f32 %v1026, %v1045
        %v1050 = vmul.f32 %v1028, %v1046
        %v1051 = vmul.f32 %v1030, %v1047
        %v1052 = vmul.f32 %v1032, %v1048
        %v1053 = vpack.c.bf16 %v1049, %v1049
        %v1054 = vpack.c.bf16 %v1050, %v1050
        %v1055 = vpack.c.bf16 %v1051, %v1051
        %v1056 = vpack.c.bf16 %v1052, %v1052
        %v1058 = vsel %vm932, %v1053, 0
        %vm1060 = vcmask 1043456
        %v1062 = vsel %vm1060, %v926, 0
        %1064 = vmatpush.bf16.msra.mxu0 0
        %1065 = vmatpush.bf16.msra.mxu0 0
        %1066 = vmatpush.bf16.msra.mxu0 0
        %1067 = vmatpush.bf16.msra.mxu0 0
        %1068 = vmatpush.bf16.msra.mxu0 0
        %1069 = vmatpush.bf16.msra.mxu0 0
        %1070 = vmatpush.bf16.msra.mxu0 0
        %1071 = vmatpush.bf16.msra.mxu0 %v1062
        %1072 = vmatmul.bf16.gmra.mxu0 %v1058
        %v1073 = vpop.f32.mrf.mxu0
        %v1074 = vadd.f32 0.0, %v1073
        %v1075 = vpop.f32.mrf.mxu0
        %1076 = vdwg.mxu0
        %v1078 = vsel %vm932, %v1054, 0
        %v1081 = vsel %vm1060, %v927, 0
        %1083 = vmatpush.bf16.msra.mxu0 0
        %1084 = vmatpush.bf16.msra.mxu0 0
        %1085 = vmatpush.bf16.msra.mxu0 0
        %1086 = vmatpush.bf16.msra.mxu0 0
        %1087 = vmatpush.bf16.msra.mxu0 0
        %1088 = vmatpush.bf16.msra.mxu0 0
        %1089 = vmatpush.bf16.msra.mxu0 0
        %1090 = vmatpush.bf16.msra.mxu0 %v1081
        %1091 = vmatmul.bf16.gmra.mxu0 %v1078
        %v1092 = vpop.f32.mrf.mxu0
        %v1093 = vadd.f32 0.0, %v1092
        %v1094 = vpop.f32.mrf.mxu0
        %1095 = vdwg.mxu0
        %v1097 = vsel %vm932, %v1055, 0
        %v1100 = vsel %vm1060, %v928, 0
        %1102 = vmatpush.bf16.msra.mxu0 0
        %1103 = vmatpush.bf16.msra.mxu0 0
        %1104 = vmatpush.bf16.msra.mxu0 0
        %1105 = vmatpush.bf16.msra.mxu0 0
        %1106 = vmatpush.bf16.msra.mxu0 0
        %1107 = vmatpush.bf16.msra.mxu0 0
        %1108 = vmatpush.bf16.msra.mxu0 0
        %1109 = vmatpush.bf16.msra.mxu0 %v1100
        %1110 = vmatmul.bf16.gmra.mxu0 %v1097
        %v1111 = vpop.f32.mrf.mxu0
        %v1112 = vadd.f32 0.0, %v1111
        %v1113 = vpop.f32.mrf.mxu0
        %1114 = vdwg.mxu0
        %v1116 = vsel %vm932, %v1056, 0
        %v1119 = vsel %vm1060, %v929, 0
        %1121 = vmatpush.bf16.msra.mxu0 0
        %1122 = vmatpush.bf16.msra.mxu0 0
        %1123 = vmatpush.bf16.msra.mxu0 0
        %1124 = vmatpush.bf16.msra.mxu0 0
        %1125 = vmatpush.bf16.msra.mxu0 0
        %1126 = vmatpush.bf16.msra.mxu0 0
        %1127 = vmatpush.bf16.msra.mxu0 0
        %1128 = vmatpush.bf16.msra.mxu0 %v1119
        %1129 = vmatmul.bf16.gmra.mxu0 %v1116
        %v1130 = vpop.f32.mrf.mxu0
        %v1131 = vadd.f32 0.0, %v1130
        %v1132 = vpop.f32.mrf.mxu0
        %1133 = vdwg.mxu0
        %v1134 = vpack.c.bf16 %v1074, %v1074
        %v1135 = vpack.c.bf16 %v1093, %v1093
        %v1136 = vpack.c.bf16 %v1112, %v1112
        %v1137 = vpack.c.bf16 %v1131, %v1131
        %v1138 = vld [vmem:[%s7] sm:$0xf]
        %v1139 = vld [vmem:[%s7 + $0x4] sm:$0xf]
        %v1140 = vld [vmem:[%s7 + $0x8] sm:$0xf]
        %v1141 = vld [vmem:[%s7 + $0xc] sm:$0xf]
        %v1143 = vsel %vm932, %v1134, 0
        %v1146 = vsel %vm1060, %v1138, 0
        %1148 = vmatpush.bf16.msra.mxu0 0
        %1149 = vmatpush.bf16.msra.mxu0 0
        %1150 = vmatpush.bf16.msra.mxu0 0
        %1151 = vmatpush.bf16.msra.mxu0 0
        %1152 = vmatpush.bf16.msra.mxu0 0
        %1153 = vmatpush.bf16.msra.mxu0 0
        %1154 = vmatpush.bf16.msra.mxu0 0
        %1155 = vmatpush.bf16.msra.mxu0 %v1146
        %1156 = vmatmul.bf16.gmra.mxu0 %v1143
        %v1157 = vpop.f32.mrf.mxu0
        %v1158 = vadd.f32 0.0, %v1157
        %v1159 = vpop.f32.mrf.mxu0
        %1160 = vdwg.mxu0
        %v1162 = vsel %vm932, %v1135, 0
        %v1165 = vsel %vm1060, %v1139, 0
        %1167 = vmatpush.bf16.msra.mxu0 0
        %1168 = vmatpush.bf16.msra.mxu0 0
        %1169 = vmatpush.bf16.msra.mxu0 0
        %1170 = vmatpush.bf16.msra.mxu0 0
        %1171 = vmatpush.bf16.msra.mxu0 0
        %1172 = vmatpush.bf16.msra.mxu0 0
        %1173 = vmatpush.bf16.msra.mxu0 0
        %1174 = vmatpush.bf16.msra.mxu0 %v1165
        %1175 = vmatmul.bf16.gmra.mxu0 %v1162
        %v1176 = vpop.f32.mrf.mxu0
        %v1177 = vadd.f32 0.0, %v1176
        %v1178 = vpop.f32.mrf.mxu0
        %1179 = vdwg.mxu0
        %v1181 = vsel %vm932, %v1136, 0
        %v1184 = vsel %vm1060, %v1140, 0
        %1186 = vmatpush.bf16.msra.mxu0 0
        %1187 = vmatpush.bf16.msra.mxu0 0
        %1188 = vmatpush.bf16.msra.mxu0 0
        %1189 = vmatpush.bf16.msra.mxu0 0
        %1190 = vmatpush.bf16.msra.mxu0 0
        %1191 = vmatpush.bf16.msra.mxu0 0
        %1192 = vmatpush.bf16.msra.mxu0 0
        %1193 = vmatpush.bf16.msra.mxu0 %v1184
        %1194 = vmatmul.bf16.gmra.mxu0 %v1181
        %v1195 = vpop.f32.mrf.mxu0
        %v1196 = vadd.f32 0.0, %v1195
        %v1197 = vpop.f32.mrf.mxu0
        %1198 = vdwg.mxu0
        %v1200 = vsel %vm932, %v1137, 0
        %v1203 = vsel %vm1060, %v1141, 0
        %1205 = vmatpush.bf16.msra.mxu0 0
        %1206 = vmatpush.bf16.msra.mxu0 0
        %1207 = vmatpush.bf16.msra.mxu0 0
        %1208 = vmatpush.bf16.msra.mxu0 0
        %1209 = vmatpush.bf16.msra.mxu0 0
        %1210 = vmatpush.bf16.msra.mxu0 0
        %1211 = vmatpush.bf16.msra.mxu0 0
        %1212 = vmatpush.bf16.msra.mxu0 %v1203
        %1213 = vmatmul.bf16.gmra.mxu0 %v1200
        %v1214 = vpop.f32.mrf.mxu0
        %v1215 = vadd.f32 0.0, %v1214
        %v1216 = vpop.f32.mrf.mxu0
        %1217 = vdwg.mxu0
        %v1218 = vsel %vm584, %v1158, 0.0
        %v1219 = vsel %vm584, %v1177, 0.0
        %v1220 = vadd.f32 %v1218, %v1219
        %v1221 = vsel %vm584, %v1196, 0.0
        %v1222 = vadd.f32 %v1220, %v1221
        %v1223 = vsel %vm584, %v1215, 0.0
        %v1224 = vadd.f32 %v1222, %v1223
        %v1225 = vadd.f32 %v1224, %v552
        %v1226 = vsel %vm584, %v1225, 0.0
        %1227 = vadd.xlane.f32.xlu0 %v1226
        %v1228 = vpop.xlane.xlu0 %1227
        %v1229 = vrcp.pop 32.0
        %v1230 = vmul.f32 32.0, %v1229
        %v1231 = vsub.f32 1.0, %v1230
        %v1232 = vmul.f32 %v1229, %v1231
        %v1233 = vadd.f32 %v1229, %v1232
        %vm1234 = vweird.f32 %v1229
        %v1235 = vsel %vm1234, %v1229, %v1233
        %v1236 = vmul.f32 %v1228, %v1235
        %v1237 = vsub.f32 %v1225, %v1236
        %v1238 = vmul.f32 %v1237, %v1237
        %v1239 = vsel %vm584, %v1238, 0.0
        %1240 = vadd.xlane.f32.xlu0 %v1239
        %v1241 = vpop.xlane.xlu0 %1240
        %v1242 = vmul.f32 %v1241, %v1235
        %v1243 = vadd.f32 %v1242, 1e-05
        %v1244 = vrsqrt.pop %v1243
        %v1245 = vmul.f32 %v1244, %v1243
        %v1246 = vmul.f32 %v1245, %v1244
        %v1247 = vmul.f32 0.5, %v1246
        %v1248 = vsub.f32 1.5, %v1247
        %v1249 = vmul.f32 %v1244, %v1248
        %vm1250 = vweird.f32 %v1243
        %vm1251 = vweird.f32 %v1244
        %vm1252 = vmor %vm1250, %vm1251
        %v1253 = vsel %vm1252, %v1244, %v1249
        %v1254 = vmul.f32 %v1237, %v1253
        %v1255 = vld [vmem:[%s8] sm:$0x1]
        %v1257 = vperm.slane %v1255, 0
        %v1259 = vmul.f32 %v1254, %v1257
        %v1260 = vld [vmem:[%s9] sm:$0x1]
        %v1262 = vperm.slane %v1260, 0
        %v1264 = vadd.f32 %v1259, %v1262
        %v1265 = vpack.c.bf16 %v1264, %v1264
        %v1266 = vld [vmem:[%s12] sm:$0xf]
        %v1267 = vld [vmem:[%s12 + $0x4] sm:$0xf]
        %v1268 = vld [vmem:[%s12 + $0x8] sm:$0xf]
        %v1269 = vld [vmem:[%s12 + $0xc] sm:$0xf]
        %v1270 = vld [vmem:[%s13] sm:$0x1]
        %v1272 = vperm.slane %v1270, 0
        %v1278 = vunpack.c.l.b16 %v1266
        %v1279 = vunpack.c.l.b16 %v1267
        %v1280 = vunpack.c.l.b16 %v1268
        %v1281 = vunpack.c.l.b16 %v1269
        %v1282 = vpack.c.b16 %v1279, %v1278
        %v1283 = vpack.c.b16 %v1281, %v1280
        %v1287 = vsel %vm584, %v1265, 0
        %1289 = vmatpush.bf16.msra.mxu0 0
        %1290 = vmatpush.bf16.msra.mxu0 0
        %1291 = vmatpush.bf16.msra.mxu0 0
        %1292 = vmatpush.bf16.msra.mxu0 0
        %1293 = vmatpush.bf16.msra.mxu0 0
        %1294 = vmatpush.bf16.msra.mxu0 0
        %1295 = vmatpush.bf16.msra.mxu0 %v1283
        %1296 = vmatpush.bf16.msra.mxu0 %v1282
        %1297 = vmatmul.bf16.gmra.mxu0 %v1287
        %v1298 = vpop.f32.mrf.mxu0
        %v1299 = vadd.f32 %v1272, %v1298
        %v1300 = vpop.f32.mrf.mxu0
        %1301 = vdwg.mxu0
        %v1302 = vmax.f32 %v1299, 0.0
        %v1303 = vpack.c.bf16 %v1302, %v1302
        %v1304 = vld [vmem:[%s14] sm:$0xf]
        %v1305 = vld [vmem:[%s14 + $0x4] sm:$0xf]
        %v1306 = vld [vmem:[%s14 + $0x8] sm:$0xf]
        %v1307 = vld [vmem:[%s14 + $0xc] sm:$0xf]
        %v1308 = vld [vmem:[%s14 + $0x10] sm:$0xf]
        %v1309 = vld [vmem:[%s14 + $0x14] sm:$0xf]
        %v1310 = vld [vmem:[%s14 + $0x18] sm:$0xf]
        %v1311 = vld [vmem:[%s14 + $0x1c] sm:$0xf]
        %v1312 = vld [vmem:[%s14 + $0x20] sm:$0xf]
        %v1313 = vld [vmem:[%s14 + $0x24] sm:$0xf]
        %v1314 = vld [vmem:[%s14 + $0x28] sm:$0xf]
        %v1315 = vld [vmem:[%s14 + $0x2c] sm:$0xf]
        %v1316 = vld [vmem:[%s14 + $0x30] sm:$0xf]
        %v1317 = vld [vmem:[%s14 + $0x34] sm:$0xf]
        %v1318 = vld [vmem:[%s14 + $0x38] sm:$0xf]
        %v1319 = vld [vmem:[%s14 + $0x3c] sm:$0xf]
        %v1320 = vld [vmem:[%s15] sm:$0x1]
        %v1322 = vperm.slane %v1320, 0
        %v1340 = vunpack.c.l.b16 %v1304
        %v1341 = vunpack.c.l.b16 %v1305
        %v1342 = vunpack.c.l.b16 %v1306
        %v1343 = vunpack.c.l.b16 %v1307
        %v1344 = vunpack.c.l.b16 %v1308
        %v1345 = vunpack.c.l.b16 %v1309
        %v1346 = vunpack.c.l.b16 %v1310
        %v1347 = vunpack.c.l.b16 %v1311
        %v1348 = vunpack.c.l.b16 %v1312
        %v1349 = vunpack.c.l.b16 %v1313
        %v1350 = vunpack.c.l.b16 %v1314
        %v1351 = vunpack.c.l.b16 %v1315
        %v1352 = vunpack.c.l.b16 %v1316
        %v1353 = vunpack.c.l.b16 %v1317
        %v1354 = vunpack.c.l.b16 %v1318
        %v1355 = vunpack.c.l.b16 %v1319
        %v1356 = vpack.c.b16 %v1341, %v1340
        %v1357 = vpack.c.b16 %v1343, %v1342
        %v1358 = vpack.c.b16 %v1345, %v1344
        %v1359 = vpack.c.b16 %v1347, %v1346
        %v1360 = vpack.c.b16 %v1349, %v1348
        %v1361 = vpack.c.b16 %v1351, %v1350
        %v1362 = vpack.c.b16 %v1353, %v1352
        %v1363 = vpack.c.b16 %v1355, %v1354
        %1372 = vmatpush.bf16.msra.mxu0 %v1363
        %1373 = vmatpush.bf16.msra.mxu0 %v1362
        %1374 = vmatpush.bf16.msra.mxu0 %v1361
        %1375 = vmatpush.bf16.msra.mxu0 %v1360
        %1376 = vmatpush.bf16.msra.mxu0 %v1359
        %1377 = vmatpush.bf16.msra.mxu0 %v1358
        %1378 = vmatpush.bf16.msra.mxu0 %v1357
        %1379 = vmatpush.bf16.msra.mxu0 %v1356
        %1380 = vmatmul.bf16.gmra.mxu0 %v1303
        %v1381 = vpop.f32.mrf.mxu0
        %v1382 = vadd.f32 %v1322, %v1381
        %v1383 = vpop.f32.mrf.mxu0
        %1384 = vdwg.mxu0
        %v1385 = vadd.f32 %v1382, %v1264
        %v1386 = vsel %vm584, %v1385, 0.0
        %1387 = vadd.xlane.f32.xlu0 %v1386
        %v1388 = vpop.xlane.xlu0 %1387
        %v1389 = vmul.f32 %v1388, %v1235
        %v1390 = vsub.f32 %v1385, %v1389
        %v1391 = vmul.f32 %v1390, %v1390
        %v1392 = vsel %vm584, %v1391, 0.0
        %1393 = vadd.xlane.f32.xlu0 %v1392
        %v1394 = vpop.xlane.xlu0 %1393
        %v1395 = vmul.f32 %v1394, %v1235
        %v1396 = vadd.f32 %v1395, 1e-05
        %v1397 = vrsqrt.pop %v1396
        %v1398 = vmul.f32 %v1397, %v1396
        %v1399 = vmul.f32 %v1398, %v1397
        %v1400 = vmul.f32 0.5, %v1399
        %v1401 = vsub.f32 1.5, %v1400
        %v1402 = vmul.f32 %v1397, %v1401
        %vm1403 = vweird.f32 %v1396
        %vm1404 = vweird.f32 %v1397
        %vm1405 = vmor %vm1403, %vm1404
        %v1406 = vsel %vm1405, %v1397, %v1402
        %v1407 = vmul.f32 %v1390, %v1406
        %v1408 = vld [vmem:[%s10] sm:$0x1]
        %v1410 = vperm.slane %v1408, 0
        %v1412 = vmul.f32 %v1407, %v1410
        %v1413 = vld [vmem:[%s11] sm:$0x1]
        %v1415 = vperm.slane %v1413, 0
        %v1417 = vadd.f32 %v1412, %v1415
        %1418 = vst.msk [vmem:[%s538] sm:$0xff] %vm584, %v1417
        %s1419 = sand.u32 %s389, 1
        %s1420 = scalar_lea.sflag [#allocation3], %s1419
        %s1421 = sand.u32 %s389, 1
        %s1422 = smul.addr %s1421, 8
        %s1423 = scalar_lea.vmem [#allocation2], %s1422
        // Predicated region
        $region85: #{tpu_custom_call.1} parent=83 // pred_check
          %p1424 = pneg %p399
        $region86: #{tpu_custom_call.1} parent=83 // pred_check_branch
          %1426 = sbr.rel (%p1424) target = $region88
        $region87: #{tpu_custom_call.1} parent=83 // pred_region
          %1428 = vsyncadd %s1420, 0
          %s1429 = smul.addr %s30, 8
          %s1430 = scalar_lea.hbm %s16, %s1429
          %s1432 = sshll.u32 %s1423, 4
          %s1433 = int_to_ptr.vmem [resolvable:$true] %s1432
          %s1434 = sshll.u32 %s1430, 4
          %s1435 = int_to_ptr.hbm [resolvable:$true] %s1434
          %1437 = dma.vmem_to_hbm [thread:$0]  %s1433, 128, %s1435, %s1420
        $region88: #{tpu_custom_call.1} parent=83 // pred_fallthru
          _
      $region84: #{tpu_custom_call.1} parent=5 // pred_fallthru
        _
      %p1438 = scmp.le.s32.totalorder 2, %s25
      // Predicated region
      $region89: #{tpu_custom_call.1} parent=5 // pred_check
        %p1439 = pneg %p1438
      $region90: #{tpu_custom_call.1} parent=5 // pred_check_branch
        %1441 = sbr.rel (%p1439) target = $region92
      $region91: #{tpu_custom_call.1} parent=5 // pred_region
        %s1442 = ssub.s32 %s25, 2
        // Predicated region
        $region93: #{tpu_custom_call.1} parent=91 // pred_check
          %p1443 = pneg %p405
        $region94: #{tpu_custom_call.1} parent=91 // pred_check_branch
          %1445 = sbr.rel (%p1443) target = $region96
        $region95: #{tpu_custom_call.1} parent=91 // pred_region
          %s1446 = sand.u32 %s390, 1
          %s1447 = scalar_lea.sflag [#allocation3], %s1446
          %s1448 = sand.u32 %s390, 1
          %s1449 = smul.addr %s1448, 8
          %s1450 = scalar_lea.vmem [#allocation2], %s1449
          %1452 = dma.done %s1447, 128
        $region96: #{tpu_custom_call.1} parent=91 // pred_fallthru
          _
      $region92: #{tpu_custom_call.1} parent=5 // pred_fallthru
        _
    $region6: #{tpu_custom_call.1} parent=1 // loop_footer
      %s29 = sadd.s32 1, %s25
    $region7: #{tpu_custom_call.1} parent=1 // loop_footer_branch
      %24 = sbr.rel target = $region3
    $region8: #{tpu_custom_call.1} parent=1 // loop_exit
      _
    %1453 = vsyncpa [#allocation3], 1
    %s1454 = scalar_lea.sflag [#allocation3], 1
    %1455 = vsyncpa %s1454, 1

</llo_original>
